<compile_context>
chip_gen: v6e
topology: v6e:2x2x1
jax: 0.10.0
libtpu: 0.0.40
codegen_flags: <defaults>
</compile_context>

<pallas_src>
import functools
import numpy as np
import jax
import jax.numpy as jnp
from jax import lax
from jax.experimental import pallas as pl
from jax.experimental.pallas import tpu as pltpu

EPS = 1e-5
KS = [45, 60, 90]          # kernel sizes hard-coded in the PyTorch module


# ----------------------------------------------------------------------------
# Pallas kernel: one batch-tile per grid step, all 3 branches fused.
# ----------------------------------------------------------------------------
def _m2dcnn_kernel(x_ref, w1t_ref, w2_ref, b2_ref, out_ref, rhs_ref,
                   *, F, T, S, BT, NB):
    # Temporal conv for ALL branches over the whole batch tile: one MXU matmul.
    #   x_ref:   (BT*S, T+1)      rows = (b, s); last lane is 1.0 (bias fold)
    #   w1t_ref: (T+1, NB*F*T)    clipped Toeplitz, BN1 scale + bias folded in
    # Dropout = identity (eval); ReLU in f32.
    y1 = jnp.maximum(
        jnp.dot(x_ref[...], w1t_ref[...], preferred_element_type=jnp.float32),
        0.0)                                              # (BT*S, NB*F*T) f32 value

    # Stage a branch-block-diagonal RHS for the single spatial-conv matmul.
    #   rows = (br, f, b, s), cols = (br, t); off-branch blocks are zero.
    rhs_ref[...] = jnp.zeros_like(rhs_ref)
    for br in range(NB):                                  # static, NB = 3
        for f in range(F):                                # static, F small
            col = (br * F + f) * T
            row = (br * F + f) * BT * S
            rhs_ref[row:row + BT * S, br * T:(br + 1) * T] = (
                y1[:, col:col + T].astype(rhs_ref.dtype))

    # Spatial conv for all branches + batch tile: ONE MXU matmul, N = NB*T lanes.
    #   w2_ref: (BT*F, NB*F*BT*S)  block-diagonal over the batch tile, BN2 folded
    z = jnp.dot(w2_ref[...], rhs_ref[...], preferred_element_type=jnp.float32)
    # conv2 bias + BN2 (eval) folded bias; Dropout = id; ReLU; single store.
    out_ref[...] = jnp.maximum(z + b2_ref[...], 0.0).astype(out_ref.dtype)


# ----------------------------------------------------------------------------
# Host-side weight preprocessing (done ONCE, not per forward call)
# ----------------------------------------------------------------------------
def prepare_weights(params, *, time_dim, space_dim, batch_tile,
                    dtype=jnp.float32):
    T, S, BT = time_dim, space_dim, batch_tile
    NB = len(params)
    F = params[0]["w1"].shape[0]
    TP1 = T + 1

    w1t = np.zeros((TP1, NB * F * T), np.float32)          # clipped Toeplitz + bias row
    w2bd = np.zeros((BT * F, NB * F * BT * S), np.float32)  # block-diag over batch tile
    b2 = np.zeros((BT * F, NB * T), np.float32)

    for br, p in enumerate(params):
        k = int(p["k"])
        pad_top = (k - 1) // 2
        w1 = np.asarray(p["w1"], np.float32)[:, 0, :, 0]    # (F, k)
        s1 = np.asarray(p["g1"], np.float32) / np.sqrt(np.asarray(p["v1"], np.float32) + EPS)
        bias1 = (s1 * (np.asarray(p["b1"], np.float32) - np.asarray(p["m1"], np.float32))
                 + np.asarray(p["be1"], np.float32))
        for f in range(F):
            wrow = (s1[f] * w1[f]).astype(np.float32)        # BN1 scale folded
            for t in range(T):
                col = (br * F + f) * T + t
                # out[t] = sum_tau w[tau] * x[t + tau - pad_top], OOB taps clipped
                lo = max(0, t - pad_top)
                hi = min(T, t - pad_top + k)
                w1t[lo:hi, col] = wrow[lo - t + pad_top: hi - t + pad_top]
                w1t[T, col] = bias1[f]                       # bias row (ones lane of x)

        w2 = np.asarray(p["w2"], np.float32)[:, :, 0, :]     # (F, F, S)
        s2 = np.asarray(p["g2"], np.float32) / np.sqrt(np.asarray(p["v2"], np.float32) + EPS)
        bias2 = (s2 * (np.asarray(p["b2"], np.float32) - np.asarray(p["m2"], np.float32))
                 + np.asarray(p["be2"], np.float32))
        w2s = (w2 * s2[:, None, None]).astype(np.float32)    # BN2 scale folded
        for b in range(BT):
            for g in range(F):
                row = b * F + g
                for f in range(F):
                    c0 = (br * F + f) * BT * S + b * S
                    w2bd[row, c0:c0 + S] = w2s[g, f]
                b2[row, br * T:(br + 1) * T] = bias2[g]

    return dict(w1t=jnp.asarray(w1t, dtype), w2=jnp.asarray(w2bd, dtype),
                b2=jnp.asarray(b2, jnp.float32),
                n_branches=NB, n_filters=F, batch_tile=BT,
                dtype=jnp.dtype(dtype).name)


# ----------------------------------------------------------------------------
# Forward wrapper
# ----------------------------------------------------------------------------
@functools.partial(jax.jit,
                   static_argnames=("n_branches", "n_filters", "batch_tile", "dtype"))
def _forward(x, w1t, w2, b2, *, n_branches, n_filters, batch_tile, dtype):
    B, C, T, S = x.shape
    assert C == 1
    NB, F, BT = n_branches, n_filters, batch_tile
    assert B % BT == 0, (B, BT)
    NT = B // BT
    cdtype = jnp.dtype(dtype)
    TP1 = T + 1

    # (B,1,T,S) -> (NT, BT*S, T+1): rows (b, s), lanes = time, trailing ones lane
    # (folds conv1+BN1 bias).  No time padding (Toeplitz rows are clipped).
    xt = jnp.transpose(x[:, 0], (0, 2, 1)).reshape(NT, BT * S, T)
    x_aug = jnp.pad(xt, ((0, 0), (0, 0), (0, 1)), constant_values=1.0).astype(cdtype)

    itemsize = cdtype.itemsize
    flops = NT * (2 * (BT * S) * TP1 * (NB * F * T)
                  + 2 * (BT * F) * (NB * F * BT * S) * (NB * T))
    bytes_accessed = (NT * BT * S * TP1 * itemsize
                      + TP1 * NB * F * T * itemsize
                      + BT * F * NB * F * BT * S * itemsize
                      + BT * F * NB * T * 4
                      + NT * BT * F * NB * T * 4)

    kernel = functools.partial(_m2dcnn_kernel, F=F, T=T, S=S, BT=BT, NB=NB)
    out = pl.pallas_call(
        kernel,
        out_shape=jax.ShapeDtypeStruct((NT, BT * F, NB * T), jnp.float32),
        grid_spec=pltpu.PrefetchScalarGridSpec(
            num_scalar_prefetch=0,
            grid=(NT,),                                         # batch tiles, parallel
            in_specs=[
                pl.BlockSpec((None, BT * S, TP1), lambda i: (i, 0, 0)),        # x tile
                pl.BlockSpec((TP1, NB * F * T), lambda i: (0, 0)),             # Toeplitz W1
                pl.BlockSpec((BT * F, NB * F * BT * S), lambda i: (0, 0)),     # block-diag W2
                pl.BlockSpec((BT * F, NB * T), lambda i: (0, 0)),              # folded bias2
            ],
            out_specs=pl.BlockSpec((None, BT * F, NB * T), lambda i: (i, 0, 0)),
            scratch_shapes=[
                pltpu.VMEM((NB * F * BT * S, NB * T), cdtype),   # staged RHS (block-diag)
            ],
        ),
        compiler_params=pltpu.CompilerParams(
            dimension_semantics=("parallel",),
            # let XLA fuse the transpose/reshape/ones-pad producer of x into the
            # kernel's input DMA (removes a separate HBM round trip / dispatch)
            allow_input_fusion=[True, False, False, False],
        ),
        cost_estimate=pl.CostEstimate(flops=flops, transcendentals=0,
                                      bytes_accessed=bytes_accessed),
    )(x_aug, w1t, w2, b2)
    return out.reshape(B, F, NB * T)                            # free metadata reshape


def m2dcnn_pallas(x, prep):
    return _forward(x, prep["w1t"], prep["w2"], prep["b2"],
                    n_branches=prep["n_branches"], n_filters=prep["n_filters"],
                    batch_tile=prep["batch_tile"], dtype=prep["dtype"])


# ----------------------------------------------------------------------------
# Parameter init (deterministic, matches shapes implied by the module __init__)
# ----------------------------------------------------------------------------
def init_params(key, space_dim, n_filters):
    params = []
    for k in KS:
        key, *sub = jax.random.split(key, 13)
        p = dict(
            k=k,
            w1=0.1 * jax.random.normal(sub[0], (n_filters, 1, k, 1), jnp.float32),
            b1=0.1 * jax.random.normal(sub[1], (n_filters,), jnp.float32),
            g1=1.0 + 0.1 * jax.random.normal(sub[2], (n_filters,), jnp.float32),
            be1=0.1 * jax.random.normal(sub[3], (n_filters,), jnp.float32),
            m1=0.1 * jax.random.normal(sub[4], (n_filters,), jnp.float32),
            v1=jax.random.uniform(sub[5], (n_filters,), jnp.float32, 0.5, 1.5),
            w2=0.1 * jax.random.normal(sub[6], (n_filters, n_filters, 1, space_dim),
                                       jnp.float32),
            b2=0.1 * jax.random.normal(sub[7], (n_filters,), jnp.float32),
            g2=1.0 + 0.1 * jax.random.normal(sub[8], (n_filters,), jnp.float32),
            be2=0.1 * jax.random.normal(sub[9], (n_filters,), jnp.float32),
            m2=0.1 * jax.random.normal(sub[10], (n_filters,), jnp.float32),
            v2=jax.random.uniform(sub[11], (n_filters,), jnp.float32, 0.5, 1.5),
        )
        params.append(p)
    return params


# ----------------------------------------------------------------------------
# Pure-JAX reference (mirrors the PyTorch forward in eval mode)
# ----------------------------------------------------------------------------
def _conv2d(x, w, b):
    out = lax.conv_general_dilated(x, w, (1, 1), "VALID",
                                   dimension_numbers=("NCHW", "OIHW", "NCHW"))
    return out + b.reshape(1, -1, 1, 1)


def _bn(x, gamma, beta, mean, var):
    r = lambda v: v.reshape(1, -1, 1, 1)
    return (x - r(mean)) / jnp.sqrt(r(var) + EPS) * r(gamma) + r(beta)


def m2dcnn_ref(x, params):
    outs = []
    for p in params:
        k = int(p["k"])
        pad_top = (k - 1) // 2
        pad_bot = k - 1 - pad_top
        xp = jnp.pad(x, ((0, 0), (0, 0), (pad_top, pad_bot), (0, 0)))
        o = _conv2d(xp, p["w1"], p["b1"])
        o = jax.nn.relu(_bn(o, p["g1"], p["be1"], p["m1"], p["v1"]))
        o = _conv2d(o, p["w2"], p["b2"])
        o = jax.nn.relu(_bn(o, p["g2"], p["be2"], p["m2"], p["v2"]))
        outs.append(o[..., 0])
    return jnp.concatenate(outs, axis=2)


if __name__ == "__main__":
    B, T, S, F = 2, 32, 8, 10          # batch, time_dim, space_dim, n_filters
    key = jax.random.PRNGKey(0)
    kx, kp, kx2 = jax.random.split(key, 3)
    x = jax.random.normal(kx, (B, 1, T, S), jnp.float32)
    params = init_params(kp, space_dim=S, n_filters=F)

    # f32 path, whole batch in one grid step (batch_tile = B)
    prep = prepare_weights(params, time_dim=T, space_dim=S, batch_tile=B)
    out = jax.block_until_ready(m2dcnn_pallas(x, prep))
    ref = jax.block_until_ready(m2dcnn_ref(x, params))
    assert out.shape == (B, F, 3 * T), out.shape
    assert jnp.allclose(out, ref, rtol=1e-4, atol=1e-4), \
        float(jnp.max(jnp.abs(out - ref)))

    # grid > 1 path: batch tiled across the parallel grid axis (same prep, BT=2)
    x4 = jax.random.normal(kx2, (2 * B, 1, T, S), jnp.float32)
    out4 = jax.block_until_ready(m2dcnn_pallas(x4, prep))        # grid = (2,)
    ref4 = m2dcnn_ref(x4, params)
    assert jnp.allclose(out4, ref4, rtol=1e-4, atol=1e-4), \
        float(jnp.max(jnp.abs(out4 - ref4)))

    # bf16 weights/activations (v6e/v7x MXU fast path), f32 accumulation/epilogue
    prep_bf16 = prepare_weights(params, time_dim=T, space_dim=S, batch_tile=B,
                                dtype=jnp.bfloat16)
    out_bf16 = jax.block_until_ready(m2dcnn_pallas(x, prep_bf16))
    assert jnp.allclose(out_bf16, ref, rtol=5e-2, atol=8e-2), \
        float(jnp.max(jnp.abs(out_bf16 - ref)))

    print("KERNEL_OK")
</pallas_src>

<mosaic_0001>
module attributes {stable_mosaic.version = 11 : i64} {
  func.func @_m2dcnn_kernel(%arg0: i32, %arg1: memref<1x16x33xf32, #tpu.memory_space<vmem>>, %arg2: memref<33x960xf32, #tpu.memory_space<vmem>>, %arg3: memref<20x480xf32, #tpu.memory_space<vmem>>, %arg4: memref<20x96xf32, #tpu.memory_space<vmem>>, %arg5: memref<1x20x96xf32, #tpu.memory_space<vmem>>, %arg6: memref<480x96xf32, #tpu.memory_space<vmem>>) attributes {dimension_semantics = [#tpu.dimension_semantics<parallel>], iteration_bounds = array<i64: 1>, scalar_prefetch = 0 : i64, scratch_operands = 1 : i64, tpu.core_type = #tpu.core_type<tc>, window_params = [{transform_indices = @transform_0, window_bounds = array<i64: 1, 16, 33>}, {pipeline_mode = #tpu.pipeline_mode<synchronous>, transform_indices = @transform_1, window_bounds = array<i64: 33, 960>}, {pipeline_mode = #tpu.pipeline_mode<synchronous>, transform_indices = @transform_2, window_bounds = array<i64: 20, 480>}, {pipeline_mode = #tpu.pipeline_mode<synchronous>, transform_indices = @transform_3, window_bounds = array<i64: 20, 96>}, {transform_indices = @transform_4, window_bounds = array<i64: 1, 20, 96>}]} {
    %c0 = arith.constant 0 : index
    %c0_0 = arith.constant 0 : index
    %c0_1 = arith.constant 0 : index
    %0 = vector.load %arg1[%c0, %c0_0, %c0_1] : memref<1x16x33xf32, #tpu.memory_space<vmem>>, vector<1x16x33xf32>
    %1 = vector.shape_cast %0 : vector<1x16x33xf32> to vector<16x33xf32>
    %c0_2 = arith.constant 0 : index
    %c0_3 = arith.constant 0 : index
    %2 = vector.load %arg2[%c0_2, %c0_3] : memref<33x960xf32, #tpu.memory_space<vmem>>, vector<33x960xf32>
    %cst = arith.constant dense<0.000000e+00> : vector<16x960xf32>
    %3 = tpu.matmul %1, %2, %cst {dimension_numbers = #tpu.dot_dimension_numbers<[1], [0], [0], [1], [0, 0, 1, 1], [], []>} : vector<16x33xf32>, vector<33x960xf32>, vector<16x960xf32> -> vector<16x960xf32>
    %cst_4 = arith.constant 0.000000e+00 : f32
    %4 = vector.broadcast %cst_4 : f32 to vector<16x960xf32>
    %5 = arith.maximumf %3, %4 : vector<16x960xf32>
    %cst_5 = arith.constant 0.000000e+00 : f32
    %6 = vector.broadcast %cst_5 : f32 to vector<480x96xf32>
    %c0_6 = arith.constant 0 : index
    %c0_7 = arith.constant 0 : index
    %7 = vector.load %arg6[%c0_6, %c0_7] : memref<480x96xf32, #tpu.memory_space<vmem>>, vector<480x96xf32>
    tpu.vector_store %arg6[%c0_6, %c0_7], %6 {strides = array<i32>} : memref<480x96xf32, #tpu.memory_space<vmem>>, vector<480x96xf32>,
    %8 = vector.extract_strided_slice %5 {offsets = [0, 0], sizes = [16, 32], strides = [1, 1]} : vector<16x960xf32> to vector<16x32xf32>
    %c0_8 = arith.constant 0 : index
    %c0_9 = arith.constant 0 : index
    %9 = vector.load %arg6[%c0_8, %c0_9] : memref<480x96xf32, #tpu.memory_space<vmem>>, vector<16x32xf32>
    tpu.vector_store %arg6[%c0_8, %c0_9], %8 {strides = array<i32>} : memref<480x96xf32, #tpu.memory_space<vmem>>, vector<16x32xf32>,
    %10 = vector.extract_strided_slice %5 {offsets = [0, 32], sizes = [16, 32], strides = [1, 1]} : vector<16x960xf32> to vector<16x32xf32>
    %c16 = arith.constant 16 : index
    %c0_10 = arith.constant 0 : index
    %11 = vector.load %arg6[%c16, %c0_10] : memref<480x96xf32, #tpu.memory_space<vmem>>, vector<16x32xf32>
    tpu.vector_store %arg6[%c16, %c0_10], %10 {strides = array<i32>} : memref<480x96xf32, #tpu.memory_space<vmem>>, vector<16x32xf32>,
    %12 = vector.extract_strided_slice %5 {offsets = [0, 64], sizes = [16, 32], strides = [1, 1]} : vector<16x960xf32> to vector<16x32xf32>
    %c32 = arith.constant 32 : index
    %c0_11 = arith.constant 0 : index
    %13 = vector.load %arg6[%c32, %c0_11] : memref<480x96xf32, #tpu.memory_space<vmem>>, vector<16x32xf32>
    tpu.vector_store %arg6[%c32, %c0_11], %12 {strides = array<i32>} : memref<480x96xf32, #tpu.memory_space<vmem>>, vector<16x32xf32>,
    %14 = vector.extract_strided_slice %5 {offsets = [0, 96], sizes = [16, 32], strides = [1, 1]} : vector<16x960xf32> to vector<16x32xf32>
    %c48 = arith.constant 48 : index
    %c0_12 = arith.constant 0 : index
    %15 = vector.load %arg6[%c48, %c0_12] : memref<480x96xf32, #tpu.memory_space<vmem>>, vector<16x32xf32>
    tpu.vector_store %arg6[%c48, %c0_12], %14 {strides = array<i32>} : memref<480x96xf32, #tpu.memory_space<vmem>>, vector<16x32xf32>,
    %16 = vector.extract_strided_slice %5 {offsets = [0, 128], sizes = [16, 32], strides = [1, 1]} : vector<16x960xf32> to vector<16x32xf32>
    %c64 = arith.constant 64 : index
    %c0_13 = arith.constant 0 : index
    %17 = vector.load %arg6[%c64, %c0_13] : memref<480x96xf32, #tpu.memory_space<vmem>>, vector<16x32xf32>
    tpu.vector_store %arg6[%c64, %c0_13], %16 {strides = array<i32>} : memref<480x96xf32, #tpu.memory_space<vmem>>, vector<16x32xf32>,
    %18 = vector.extract_strided_slice %5 {offsets = [0, 160], sizes = [16, 32], strides = [1, 1]} : vector<16x960xf32> to vector<16x32xf32>
    %c80 = arith.constant 80 : index
    %c0_14 = arith.constant 0 : index
    %19 = vector.load %arg6[%c80, %c0_14] : memref<480x96xf32, #tpu.memory_space<vmem>>, vector<16x32xf32>
    tpu.vector_store %arg6[%c80, %c0_14], %18 {strides = array<i32>} : memref<480x96xf32, #tpu.memory_space<vmem>>, vector<16x32xf32>,
    %20 = vector.extract_strided_slice %5 {offsets = [0, 192], sizes = [16, 32], strides = [1, 1]} : vector<16x960xf32> to vector<16x32xf32>
    %c96 = arith.constant 96 : index
    %c0_15 = arith.constant 0 : index
    %21 = vector.load %arg6[%c96, %c0_15] : memref<480x96xf32, #tpu.memory_space<vmem>>, vector<16x32xf32>
    tpu.vector_store %arg6[%c96, %c0_15], %20 {strides = array<i32>} : memref<480x96xf32, #tpu.memory_space<vmem>>, vector<16x32xf32>,
    %22 = vector.extract_strided_slice %5 {offsets = [0, 224], sizes = [16, 32], strides = [1, 1]} : vector<16x960xf32> to vector<16x32xf32>
    %c112 = arith.constant 112 : index
    %c0_16 = arith.constant 0 : index
    %23 = vector.load %arg6[%c112, %c0_16] : memref<480x96xf32, #tpu.memory_space<vmem>>, vector<16x32xf32>
    tpu.vector_store %arg6[%c112, %c0_16], %22 {strides = array<i32>} : memref<480x96xf32, #tpu.memory_space<vmem>>, vector<16x32xf32>,
    %24 = vector.extract_strided_slice %5 {offsets = [0, 256], sizes = [16, 32], strides = [1, 1]} : vector<16x960xf32> to vector<16x32xf32>
    %c128 = arith.constant 128 : index
    %c0_17 = arith.constant 0 : index
    %25 = vector.load %arg6[%c128, %c0_17] : memref<480x96xf32, #tpu.memory_space<vmem>>, vector<16x32xf32>
    tpu.vector_store %arg6[%c128, %c0_17], %24 {strides = array<i32>} : memref<480x96xf32, #tpu.memory_space<vmem>>, vector<16x32xf32>,
    %26 = vector.extract_strided_slice %5 {offsets = [0, 288], sizes = [16, 32], strides = [1, 1]} : vector<16x960xf32> to vector<16x32xf32>
    %c144 = arith.constant 144 : index
    %c0_18 = arith.constant 0 : index
    %27 = vector.load %arg6[%c144, %c0_18] : memref<480x96xf32, #tpu.memory_space<vmem>>, vector<16x32xf32>
    tpu.vector_store %arg6[%c144, %c0_18], %26 {strides = array<i32>} : memref<480x96xf32, #tpu.memory_space<vmem>>, vector<16x32xf32>,
    %28 = vector.extract_strided_slice %5 {offsets = [0, 320], sizes = [16, 32], strides = [1, 1]} : vector<16x960xf32> to vector<16x32xf32>
    %c160 = arith.constant 160 : index
    %c32_19 = arith.constant 32 : index
    %29 = vector.load %arg6[%c160, %c32_19] : memref<480x96xf32, #tpu.memory_space<vmem>>, vector<16x32xf32>
    tpu.vector_store %arg6[%c160, %c32_19], %28 {strides = array<i32>} : memref<480x96xf32, #tpu.memory_space<vmem>>, vector<16x32xf32>,
    %30 = vector.extract_strided_slice %5 {offsets = [0, 352], sizes = [16, 32], strides = [1, 1]} : vector<16x960xf32> to vector<16x32xf32>
    %c176 = arith.constant 176 : index
    %c32_20 = arith.constant 32 : index
    %31 = vector.load %arg6[%c176, %c32_20] : memref<480x96xf32, #tpu.memory_space<vmem>>, vector<16x32xf32>
    tpu.vector_store %arg6[%c176, %c32_20], %30 {strides = array<i32>} : memref<480x96xf32, #tpu.memory_space<vmem>>, vector<16x32xf32>,
    %32 = vector.extract_strided_slice %5 {offsets = [0, 384], sizes = [16, 32], strides = [1, 1]} : vector<16x960xf32> to vector<16x32xf32>
    %c192 = arith.constant 192 : index
    %c32_21 = arith.constant 32 : index
    %33 = vector.load %arg6[%c192, %c32_21] : memref<480x96xf32, #tpu.memory_space<vmem>>, vector<16x32xf32>
    tpu.vector_store %arg6[%c192, %c32_21], %32 {strides = array<i32>} : memref<480x96xf32, #tpu.memory_space<vmem>>, vector<16x32xf32>,
    %34 = vector.extract_strided_slice %5 {offsets = [0, 416], sizes = [16, 32], strides = [1, 1]} : vector<16x960xf32> to vector<16x32xf32>
    %c208 = arith.constant 208 : index
    %c32_22 = arith.constant 32 : index
    %35 = vector.load %arg6[%c208, %c32_22] : memref<480x96xf32, #tpu.memory_space<vmem>>, vector<16x32xf32>
    tpu.vector_store %arg6[%c208, %c32_22], %34 {strides = array<i32>} : memref<480x96xf32, #tpu.memory_space<vmem>>, vector<16x32xf32>,
    %36 = vector.extract_strided_slice %5 {offsets = [0, 448], sizes = [16, 32], strides = [1, 1]} : vector<16x960xf32> to vector<16x32xf32>
    %c224 = arith.constant 224 : index
    %c32_23 = arith.constant 32 : index
    %37 = vector.load %arg6[%c224, %c32_23] : memref<480x96xf32, #tpu.memory_space<vmem>>, vector<16x32xf32>
    tpu.vector_store %arg6[%c224, %c32_23], %36 {strides = array<i32>} : memref<480x96xf32, #tpu.memory_space<vmem>>, vector<16x32xf32>,
    %38 = vector.extract_strided_slice %5 {offsets = [0, 480], sizes = [16, 32], strides = [1, 1]} : vector<16x960xf32> to vector<16x32xf32>
    %c240 = arith.constant 240 : index
    %c32_24 = arith.constant 32 : index
    %39 = vector.load %arg6[%c240, %c32_24] : memref<480x96xf32, #tpu.memory_space<vmem>>, vector<16x32xf32>
    tpu.vector_store %arg6[%c240, %c32_24], %38 {strides = array<i32>} : memref<480x96xf32, #tpu.memory_space<vmem>>, vector<16x32xf32>,
    %40 = vector.extract_strided_slice %5 {offsets = [0, 512], sizes = [16, 32], strides = [1, 1]} : vector<16x960xf32> to vector<16x32xf32>
    %c256 = arith.constant 256 : index
    %c32_25 = arith.constant 32 : index
    %41 = vector.load %arg6[%c256, %c32_25] : memref<480x96xf32, #tpu.memory_space<vmem>>, vector<16x32xf32>
    tpu.vector_store %arg6[%c256, %c32_25], %40 {strides = array<i32>} : memref<480x96xf32, #tpu.memory_space<vmem>>, vector<16x32xf32>,
    %42 = vector.extract_strided_slice %5 {offsets = [0, 544], sizes = [16, 32], strides = [1, 1]} : vector<16x960xf32> to vector<16x32xf32>
    %c272 = arith.constant 272 : index
    %c32_26 = arith.constant 32 : index
    %43 = vector.load %arg6[%c272, %c32_26] : memref<480x96xf32, #tpu.memory_space<vmem>>, vector<16x32xf32>
    tpu.vector_store %arg6[%c272, %c32_26], %42 {strides = array<i32>} : memref<480x96xf32, #tpu.memory_space<vmem>>, vector<16x32xf32>,
    %44 = vector.extract_strided_slice %5 {offsets = [0, 576], sizes = [16, 32], strides = [1, 1]} : vector<16x960xf32> to vector<16x32xf32>
    %c288 = arith.constant 288 : index
    %c32_27 = arith.constant 32 : index
    %45 = vector.load %arg6[%c288, %c32_27] : memref<480x96xf32, #tpu.memory_space<vmem>>, vector<16x32xf32>
    tpu.vector_store %arg6[%c288, %c32_27], %44 {strides = array<i32>} : memref<480x96xf32, #tpu.memory_space<vmem>>, vector<16x32xf32>,
    %46 = vector.extract_strided_slice %5 {offsets = [0, 608], sizes = [16, 32], strides = [1, 1]} : vector<16x960xf32> to vector<16x32xf32>
    %c304 = arith.constant 304 : index
    %c32_28 = arith.constant 32 : index
    %47 = vector.load %arg6[%c304, %c32_28] : memref<480x96xf32, #tpu.memory_space<vmem>>, vector<16x32xf32>
    tpu.vector_store %arg6[%c304, %c32_28], %46 {strides = array<i32>} : memref<480x96xf32, #tpu.memory_space<vmem>>, vector<16x32xf32>,
    %48 = vector.extract_strided_slice %5 {offsets = [0, 640], sizes = [16, 32], strides = [1, 1]} : vector<16x960xf32> to vector<16x32xf32>
    %c320 = arith.constant 320 : index
    %c64_29 = arith.constant 64 : index
    %49 = vector.load %arg6[%c320, %c64_29] : memref<480x96xf32, #tpu.memory_space<vmem>>, vector<16x32xf32>
    tpu.vector_store %arg6[%c320, %c64_29], %48 {strides = array<i32>} : memref<480x96xf32, #tpu.memory_space<vmem>>, vector<16x32xf32>,
    %50 = vector.extract_strided_slice %5 {offsets = [0, 672], sizes = [16, 32], strides = [1, 1]} : vector<16x960xf32> to vector<16x32xf32>
    %c336 = arith.constant 336 : index
    %c64_30 = arith.constant 64 : index
    %51 = vector.load %arg6[%c336, %c64_30] : memref<480x96xf32, #tpu.memory_space<vmem>>, vector<16x32xf32>
    tpu.vector_store %arg6[%c336, %c64_30], %50 {strides = array<i32>} : memref<480x96xf32, #tpu.memory_space<vmem>>, vector<16x32xf32>,
    %52 = vector.extract_strided_slice %5 {offsets = [0, 704], sizes = [16, 32], strides = [1, 1]} : vector<16x960xf32> to vector<16x32xf32>
    %c352 = arith.constant 352 : index
    %c64_31 = arith.constant 64 : index
    %53 = vector.load %arg6[%c352, %c64_31] : memref<480x96xf32, #tpu.memory_space<vmem>>, vector<16x32xf32>
    tpu.vector_store %arg6[%c352, %c64_31], %52 {strides = array<i32>} : memref<480x96xf32, #tpu.memory_space<vmem>>, vector<16x32xf32>,
    %54 = vector.extract_strided_slice %5 {offsets = [0, 736], sizes = [16, 32], strides = [1, 1]} : vector<16x960xf32> to vector<16x32xf32>
    %c368 = arith.constant 368 : index
    %c64_32 = arith.constant 64 : index
    %55 = vector.load %arg6[%c368, %c64_32] : memref<480x96xf32, #tpu.memory_space<vmem>>, vector<16x32xf32>
    tpu.vector_store %arg6[%c368, %c64_32], %54 {strides = array<i32>} : memref<480x96xf32, #tpu.memory_space<vmem>>, vector<16x32xf32>,
    %56 = vector.extract_strided_slice %5 {offsets = [0, 768], sizes = [16, 32], strides = [1, 1]} : vector<16x960xf32> to vector<16x32xf32>
    %c384 = arith.constant 384 : index
    %c64_33 = arith.constant 64 : index
    %57 = vector.load %arg6[%c384, %c64_33] : memref<480x96xf32, #tpu.memory_space<vmem>>, vector<16x32xf32>
    tpu.vector_store %arg6[%c384, %c64_33], %56 {strides = array<i32>} : memref<480x96xf32, #tpu.memory_space<vmem>>, vector<16x32xf32>,
    %58 = vector.extract_strided_slice %5 {offsets = [0, 800], sizes = [16, 32], strides = [1, 1]} : vector<16x960xf32> to vector<16x32xf32>
    %c400 = arith.constant 400 : index
    %c64_34 = arith.constant 64 : index
    %59 = vector.load %arg6[%c400, %c64_34] : memref<480x96xf32, #tpu.memory_space<vmem>>, vector<16x32xf32>
    tpu.vector_store %arg6[%c400, %c64_34], %58 {strides = array<i32>} : memref<480x96xf32, #tpu.memory_space<vmem>>, vector<16x32xf32>,
    %60 = vector.extract_strided_slice %5 {offsets = [0, 832], sizes = [16, 32], strides = [1, 1]} : vector<16x960xf32> to vector<16x32xf32>
    %c416 = arith.constant 416 : index
    %c64_35 = arith.constant 64 : index
    %61 = vector.load %arg6[%c416, %c64_35] : memref<480x96xf32, #tpu.memory_space<vmem>>, vector<16x32xf32>
    tpu.vector_store %arg6[%c416, %c64_35], %60 {strides = array<i32>} : memref<480x96xf32, #tpu.memory_space<vmem>>, vector<16x32xf32>,
    %62 = vector.extract_strided_slice %5 {offsets = [0, 864], sizes = [16, 32], strides = [1, 1]} : vector<16x960xf32> to vector<16x32xf32>
    %c432 = arith.constant 432 : index
    %c64_36 = arith.constant 64 : index
    %63 = vector.load %arg6[%c432, %c64_36] : memref<480x96xf32, #tpu.memory_space<vmem>>, vector<16x32xf32>
    tpu.vector_store %arg6[%c432, %c64_36], %62 {strides = array<i32>} : memref<480x96xf32, #tpu.memory_space<vmem>>, vector<16x32xf32>,
    %64 = vector.extract_strided_slice %5 {offsets = [0, 896], sizes = [16, 32], strides = [1, 1]} : vector<16x960xf32> to vector<16x32xf32>
    %c448 = arith.constant 448 : index
    %c64_37 = arith.constant 64 : index
    %65 = vector.load %arg6[%c448, %c64_37] : memref<480x96xf32, #tpu.memory_space<vmem>>, vector<16x32xf32>
    tpu.vector_store %arg6[%c448, %c64_37], %64 {strides = array<i32>} : memref<480x96xf32, #tpu.memory_space<vmem>>, vector<16x32xf32>,
    %66 = vector.extract_strided_slice %5 {offsets = [0, 928], sizes = [16, 32], strides = [1, 1]} : vector<16x960xf32> to vector<16x32xf32>
    %c464 = arith.constant 464 : index
    %c64_38 = arith.constant 64 : index
    %67 = vector.load %arg6[%c464, %c64_38] : memref<480x96xf32, #tpu.memory_space<vmem>>, vector<16x32xf32>
    tpu.vector_store %arg6[%c464, %c64_38], %66 {strides = array<i32>} : memref<480x96xf32, #tpu.memory_space<vmem>>, vector<16x32xf32>,
    %c0_39 = arith.constant 0 : index
    %c0_40 = arith.constant 0 : index
    %68 = vector.load %arg3[%c0_39, %c0_40] : memref<20x480xf32, #tpu.memory_space<vmem>>, vector<20x480xf32>
    %c0_41 = arith.constant 0 : index
    %c0_42 = arith.constant 0 : index
    %69 = vector.load %arg6[%c0_41, %c0_42] : memref<480x96xf32, #tpu.memory_space<vmem>>, vector<480x96xf32>
    %cst_43 = arith.constant dense<0.000000e+00> : vector<20x96xf32>
    %70 = tpu.matmul %68, %69, %cst_43 {dimension_numbers = #tpu.dot_dimension_numbers<[1], [0], [0], [1], [0, 0, 1, 1], [], []>} : vector<20x480xf32>, vector<480x96xf32>, vector<20x96xf32> -> vector<20x96xf32>
    %c0_44 = arith.constant 0 : index
    %c0_45 = arith.constant 0 : index
    %71 = vector.load %arg4[%c0_44, %c0_45] : memref<20x96xf32, #tpu.memory_space<vmem>>, vector<20x96xf32>
    %72 = arith.addf %70, %71 : vector<20x96xf32>
    %cst_46 = arith.constant 0.000000e+00 : f32
    %73 = vector.broadcast %cst_46 : f32 to vector<20x96xf32>
    %74 = arith.maximumf %72, %73 : vector<20x96xf32>
    %c0_47 = arith.constant 0 : index
    %c0_48 = arith.constant 0 : index
    %c0_49 = arith.constant 0 : index
    %75 = vector.load %arg5[%c0_47, %c0_48, %c0_49] : memref<1x20x96xf32, #tpu.memory_space<vmem>>, vector<1x20x96xf32>
    %76 = vector.shape_cast %75 : vector<1x20x96xf32> to vector<20x96xf32>
    %77 = vector.shape_cast %74 : vector<20x96xf32> to vector<1x20x96xf32>
    tpu.vector_store %arg5[%c0_47, %c0_48, %c0_49], %77 {strides = array<i32>} : memref<1x20x96xf32, #tpu.memory_space<vmem>>, vector<1x20x96xf32>,
    return
  }
  func.func @transform_0(%arg0: i32) -> (i32, i32, i32) {
    %c0_i32 = arith.constant 0 : i32
    %c0_i32_0 = arith.constant 0 : i32
    %c0_i32_1 = arith.constant 0 : i32
    return %arg0, %c0_i32, %c0_i32_0 : i32, i32, i32
  }
  func.func @transform_1(%arg0: i32) -> (i32, i32) {
    %c0_i32 = arith.constant 0 : i32
    %c0_i32_0 = arith.constant 0 : i32
    %c0_i32_1 = arith.constant 0 : i32
    return %c0_i32, %c0_i32_0 : i32, i32
  }
  func.func @transform_2(%arg0: i32) -> (i32, i32) {
    %c0_i32 = arith.constant 0 : i32
    %c0_i32_0 = arith.constant 0 : i32
    %c0_i32_1 = arith.constant 0 : i32
    return %c0_i32, %c0_i32_0 : i32, i32
  }
  func.func @transform_3(%arg0: i32) -> (i32, i32) {
    %c0_i32 = arith.constant 0 : i32
    %c0_i32_0 = arith.constant 0 : i32
    %c0_i32_1 = arith.constant 0 : i32
    return %c0_i32, %c0_i32_0 : i32, i32
  }
  func.func @transform_4(%arg0: i32) -> (i32, i32, i32) {
    %c0_i32 = arith.constant 0 : i32
    %c0_i32_0 = arith.constant 0 : i32
    %c0_i32_1 = arith.constant 0 : i32
    return %arg0, %c0_i32, %c0_i32_0 : i32, i32, i32
  }
}

</mosaic_0001>

<llo_original>
// kernel: _forward.2
$region0: #{_forward.2}
  #allocation0 [shape = 'u32[]', space=smem, size = 0x4, offset = 0x4, fixed_abs, tag = 'smem constant byte address 0x4 - core index']
  #allocation1 [shape = 'u32[144,128]{1,0:T(1,128)}', space=vmem, size = 0x12000, scoped, tag = 'internal scratch']
  #allocation2 [shape = 'f32[480,96]{1,0:T(8,128)}', space=vmem, size = 0x3c000, scoped, tag = 'scratch operand']
  #allocation3 [shape = 'u32[2048]{0}', space=vmem, size = 0x2000, scoped, tag = 'scoped memory for _forward.2']
  #allocation4 [shape = 'u32[2048]{0}', space=vmem, size = 0x2000, scoped, tag = 'scoped memory for _forward.2']
  #allocation5 [shape = 'u32[2048]{0}', space=vmem, size = 0x2000, scoped, tag = 'scoped memory for _forward.2']
  #allocation6 [shape = 'u32[2048]{0}', space=vmem, size = 0x2000, scoped, tag = 'scoped memory for _forward.2']
  #allocation7 [shape = 'u32[2048]{0}', space=vmem, size = 0x2000, scoped, tag = 'scoped memory for _forward.2']
  %s0 = inlined_call_operand.hbm [shape: f32[33,960], index: 0, kind: input, shape index: {}]
  %s1 = inlined_call_operand.hbm [shape: f32[20,480], index: 1, kind: input, shape index: {}]
  %s2 = inlined_call_operand.hbm [shape: f32[20,96], index: 2, kind: input, shape index: {}]
  %s3 = inlined_call_operand.hbm [shape: f32[1,16,32], index: 3, kind: input, shape index: {}]
  %s4 = inlined_call_operand.<no memory space> [shape: f32[], index: 4, kind: input, shape index: {}]
  %s5 = inlined_call_operand.vmem [shape: f32[1,20,96], index: 5, kind: output, shape index: {}]
  %s6 = sld [smem:[#allocation0]]
  $region42: #{_forward.2} parent=0
    _
  %s8 = ssub.s32 1, %s6
  %s9 = scalar_select 0, %s8, %s6
  %v10 = vstv %s4
  $region1: #{_forward.2} parent=0
    #allocation8 [shape = 'u8[8192]{0}', space=vmem, size = 0x2000, scoped, tag = 'operand span for operand 3']
    #allocation9 [shape = 's32[1]{0}', space=sflag, size = 0x4, scoped, tag = 'scoped memory for _forward.2']
    #allocation10 [shape = 'u8[163840]{0}', space=vmem, size = 0x28000, scoped, tag = 'input window, operand 1, single buffered']
    #allocation11 [shape = 's32[1]{0}', space=sflag, size = 0x4, scoped, tag = 'scoped memory for _forward.2']
    #allocation12 [shape = 'u8[49152]{0}', space=vmem, size = 0xc000, scoped, tag = 'input window, operand 2, single buffered']
    #allocation13 [shape = 'u8[12288]{0}', space=vmem, size = 0x3000, scoped, tag = 'input window, operand 3, single buffered']
    #allocation14 [shape = 's32[1]{0}', space=sflag, size = 0x4, scoped, tag = 'scoped memory for _forward.2']
    #allocation15 [shape = 'u8[8192]{0}', space=vmem, size = 0x2000, dematerialized = true, scoped, tag = 'FusionAdapter Buffer %fusion.1 = f32[1,16,33]{2,1,0:T(8,128)} fusion(%param_3.1, %param_4), kind=kLoop, calls=%fused_computation.1.clone, metadata={op_name="jit(_forward)/jit(_pad)/pad" stack_frame_id=10}']
    %11 = vsyncpa [#allocation9], 0
    %12 = vsyncpa [#allocation11], 0
    %13 = vsyncpa [#allocation14], 0
    // Predicated region
    $region2: #{_forward.2} parent=1 // pred_check
      _
    $region3: #{_forward.2} parent=1 // pred_check_branch
      %15 = sbr.rel (0) target = $region5
    $region4: #{_forward.2} parent=1 // pred_region
      %s17 = ssub.s32 256, 256
      %18 = vsyncadd [#allocation9], %s17
      %s19 = sshll.u32 [#allocation8], 4
      %s20 = int_to_ptr.vmem [resolvable:$true] %s19
      %25 = dma.hbm_to_vmem [thread:$0]  %s3, 256, %s20, [#allocation9], 128, 128, 8
    $region5: #{_forward.2} parent=1 // pred_fallthru
      _
    // Predicated region
    $region6: #{_forward.2} parent=1 // pred_check
      _
    $region7: #{_forward.2} parent=1 // pred_check_branch
      %27 = sbr.rel (0) target = $region9
    $region8: #{_forward.2} parent=1 // pred_region
      %s29 = ssub.s32 5120, 5120
      %30 = vsyncadd [#allocation11], %s29
      %s31 = sshll.u32 [#allocation10], 4
      %s32 = int_to_ptr.vmem [resolvable:$true] %s31
      %37 = dma.hbm_to_vmem [thread:$0]  %s0, 5120, %s32, [#allocation11], 1024, 1024, 64
    $region9: #{_forward.2} parent=1 // pred_fallthru
      _
    // Predicated region
    $region10: #{_forward.2} parent=1 // pred_check
      _
    $region11: #{_forward.2} parent=1 // pred_check_branch
      %39 = sbr.rel (0) target = $region13
    $region12: #{_forward.2} parent=1 // pred_region
      %s41 = ssub.s32 1536, 1536
      %42 = vsyncadd [#allocation11], %s41
      %s43 = sshll.u32 [#allocation12], 4
      %s44 = int_to_ptr.vmem [resolvable:$true] %s43
      %49 = dma.hbm_to_vmem [thread:$0]  %s1, 1536, %s44, [#allocation11], 512, 512, 32
    $region13: #{_forward.2} parent=1 // pred_fallthru
      _
    // Predicated region
    $region14: #{_forward.2} parent=1 // pred_check
      _
    $region15: #{_forward.2} parent=1 // pred_check_branch
      %51 = sbr.rel (0) target = $region17
    $region16: #{_forward.2} parent=1 // pred_region
      %s53 = ssub.s32 384, 384
      %54 = vsyncadd [#allocation14], %s53
      %s55 = sshll.u32 [#allocation13], 4
      %s56 = int_to_ptr.vmem [resolvable:$true] %s55
      %61 = dma.hbm_to_vmem [thread:$0]  %s2, 384, %s56, [#allocation14], 128, 128, 8
    $region17: #{_forward.2} parent=1 // pred_fallthru
      _
    // Predicated region
    $region18: #{_forward.2} parent=1 // pred_check
      _
    $region19: #{_forward.2} parent=1 // pred_check_branch
      %63 = sbr.rel (0) target = $region21
    $region20: #{_forward.2} parent=1 // pred_region
      %64 = dma.done [#allocation9], 256
    $region21: #{_forward.2} parent=1 // pred_fallthru
      _
    // Predicated region
    $region22: #{_forward.2} parent=1 // pred_check
      _
    $region23: #{_forward.2} parent=1 // pred_check_branch
      %66 = sbr.rel (0) target = $region25
    $region24: #{_forward.2} parent=1 // pred_region
      %67 = dma.done [#allocation11], 5120
    $region25: #{_forward.2} parent=1 // pred_fallthru
      _
    // Predicated region
    $region26: #{_forward.2} parent=1 // pred_check
      _
    $region27: #{_forward.2} parent=1 // pred_check_branch
      %69 = sbr.rel (0) target = $region29
    $region28: #{_forward.2} parent=1 // pred_region
      %70 = dma.done [#allocation11], 1536
    $region29: #{_forward.2} parent=1 // pred_fallthru
      _
    // Predicated region
    $region30: #{_forward.2} parent=1 // pred_check
      _
    $region31: #{_forward.2} parent=1 // pred_check_branch
      %72 = sbr.rel (0) target = $region33
    $region32: #{_forward.2} parent=1 // pred_region
      %73 = dma.done [#allocation14], 384
    $region33: #{_forward.2} parent=1 // pred_fallthru
      _
    %v74 = vld [vmem:[#allocation8] sm:$0xff]
    %v75 = vlaneseq
    %v76 = vand.u32 %v75, 127
    %vm78 = vcmp.lt.s32.totalorder %v76, 32
    %v79 = vsel %vm78, %v74, %v10
    %s81 = ssub.s32 256, 1
    %82 = vst [vmem:[#allocation15] sm:%s81] %v79
    %s83 = scalar_lea.vmem [#allocation8], 8
    %v84 = vld [vmem:[%s83] sm:$0xff]
    %v85 = vlaneseq
    %v86 = vand.u32 %v85, 127
    %vm88 = vcmp.lt.s32.totalorder %v86, 32
    %v89 = vsel %vm88, %v84, %v10
    %s90 = scalar_lea.vmem [#allocation15], 8
    %s92 = ssub.s32 256, 1
    %93 = vst [vmem:[%s90] sm:%s92] %v89
    %v94 = vld [vmem:[#allocation15] sm:$0xff]
    %v95 = vld [vmem:[#allocation15 + $0x8] sm:$0xff]
    %v96 = vld [vmem:[#allocation10] sm:$0xff]
    %v97 = vld [vmem:[#allocation10 + $0x8] sm:$0xff]
    %v98 = vld [vmem:[#allocation10 + $0x10] sm:$0xff]
    %v99 = vld [vmem:[#allocation10 + $0x18] sm:$0xff]
    %v100 = vld [vmem:[#allocation10 + $0x20] sm:$0xff]
    %v101 = vld [vmem:[#allocation10 + $0x28] sm:$0xff]
    %v102 = vld [vmem:[#allocation10 + $0x30] sm:$0xff]
    %v103 = vld [vmem:[#allocation10 + $0x38] sm:$0xff]
    %v104 = vld [vmem:[#allocation10 + $0x40] sm:$0xff]
    %v105 = vld [vmem:[#allocation10 + $0x48] sm:$0xff]
    %v106 = vld [vmem:[#allocation10 + $0x50] sm:$0xff]
    %v107 = vld [vmem:[#allocation10 + $0x58] sm:$0xff]
    %v108 = vld [vmem:[#allocation10 + $0x60] sm:$0xff]
    %v109 = vld [vmem:[#allocation10 + $0x68] sm:$0xff]
    %v110 = vld [vmem:[#allocation10 + $0x70] sm:$0xff]
    %v111 = vld [vmem:[#allocation10 + $0x78] sm:$0xff]
    %v112 = vld [vmem:[#allocation10 + $0x80] sm:$0xff]
    %v113 = vld [vmem:[#allocation10 + $0x88] sm:$0xff]
    %v114 = vld [vmem:[#allocation10 + $0x90] sm:$0xff]
    %v115 = vld [vmem:[#allocation10 + $0x98] sm:$0xff]
    %v116 = vld [vmem:[#allocation10 + $0xa0] sm:$0xff]
    %v117 = vld [vmem:[#allocation10 + $0xa8] sm:$0xff]
    %v118 = vld [vmem:[#allocation10 + $0xb0] sm:$0xff]
    %v119 = vld [vmem:[#allocation10 + $0xb8] sm:$0xff]
    %v120 = vld [vmem:[#allocation10 + $0xc0] sm:$0xff]
    %v121 = vld [vmem:[#allocation10 + $0xc8] sm:$0xff]
    %v122 = vld [vmem:[#allocation10 + $0xd0] sm:$0xff]
    %v123 = vld [vmem:[#allocation10 + $0xd8] sm:$0xff]
    %v124 = vld [vmem:[#allocation10 + $0xe0] sm:$0xff]
    %v125 = vld [vmem:[#allocation10 + $0xe8] sm:$0xff]
    %v126 = vld [vmem:[#allocation10 + $0xf0] sm:$0xff]
    %v127 = vld [vmem:[#allocation10 + $0xf8] sm:$0xff]
    %v128 = vld [vmem:[#allocation10 + $0x100] sm:$0x1]
    %v129 = vld [vmem:[#allocation10 + $0x108] sm:$0x1]
    %v130 = vld [vmem:[#allocation10 + $0x110] sm:$0x1]
    %v131 = vld [vmem:[#allocation10 + $0x118] sm:$0x1]
    %v132 = vld [vmem:[#allocation10 + $0x120] sm:$0x1]
    %v133 = vld [vmem:[#allocation10 + $0x128] sm:$0x1]
    %v134 = vld [vmem:[#allocation10 + $0x130] sm:$0x1]
    %v135 = vld [vmem:[#allocation10 + $0x138] sm:$0x1]
    %vm136 = vcmask 269312
    %v138 = vsel %vm136, %v94, 0
    %v141 = vsel %vm136, %v95, 0
    %vm143 = vcmask 1040384
    %v145 = vsel %vm143, %v128, 0
    %v148 = vsel %vm143, %v129, 0
    %v151 = vsel %vm143, %v130, 0
    %v154 = vsel %vm143, %v131, 0
    %v157 = vsel %vm143, %v132, 0
    %v160 = vsel %vm143, %v133, 0
    %v163 = vsel %vm143, %v134, 0
    %v166 = vsel %vm143, %v135, 0
    %168 = vmatprep.subr.mxu0 0.0
    %169 = vmatpush1.msra.mxu0 0.0
    %170 = vmatprep.subr.mxu0 0.0
    %171 = vmatpush1.msra.mxu0 0.0
    %172 = vmatprep.subr.mxu0 0.0
    %173 = vmatpush1.msra.mxu0 0.0
    %174 = vmatprep.subr.mxu0 0.0
    %175 = vmatpush1.msra.mxu0 0.0
    %176 = vmatprep.subr.mxu0 0.0
    %177 = vmatpush1.msra.mxu0 0.0
    %178 = vmatprep.subr.mxu0 0.0
    %179 = vmatpush1.msra.mxu0 0.0
    %180 = vmatprep.subr.mxu0 0.0
    %181 = vmatpush1.msra.mxu0 0.0
    %182 = vmatprep.subr.mxu0 0.0
    %183 = vmatpush1.msra.mxu0 0.0
    %184 = vmatprep.subr.mxu0 0.0
    %185 = vmatpush1.msra.mxu0 0.0
    %186 = vmatprep.subr.mxu0 0.0
    %187 = vmatpush1.msra.mxu0 0.0
    %188 = vmatprep.subr.mxu0 0.0
    %189 = vmatpush1.msra.mxu0 0.0
    %190 = vmatprep.subr.mxu0 %v148
    %191 = vmatpush1.msra.mxu0 %v145
    %192 = vmatprep.subr.mxu0 %v121
    %193 = vmatpush1.msra.mxu0 %v120
    %194 = vmatprep.subr.mxu0 %v113
    %195 = vmatpush1.msra.mxu0 %v112
    %196 = vmatprep.subr.mxu0 %v105
    %197 = vmatpush1.msra.mxu0 %v104
    %198 = vmatprep.subr.mxu0 %v97
    %199 = vmatpush1.msra.mxu0 %v96
    %200 = vmatprep.subr.mxu0 0.0
    %201 = vmatpush2.msra.mxu0 0.0
    %202 = vmatprep.subr.mxu0 0.0
    %203 = vmatpush2.msra.mxu0 0.0
    %204 = vmatprep.subr.mxu0 0.0
    %205 = vmatpush2.msra.mxu0 0.0
    %206 = vmatprep.subr.mxu0 0.0
    %207 = vmatpush2.msra.mxu0 0.0
    %208 = vmatprep.subr.mxu0 0.0
    %209 = vmatpush2.msra.mxu0 0.0
    %210 = vmatprep.subr.mxu0 0.0
    %211 = vmatpush2.msra.mxu0 0.0
    %212 = vmatprep.subr.mxu0 0.0
    %213 = vmatpush2.msra.mxu0 0.0
    %214 = vmatprep.subr.mxu0 0.0
    %215 = vmatpush2.msra.mxu0 0.0
    %216 = vmatprep.subr.mxu0 0.0
    %217 = vmatpush2.msra.mxu0 0.0
    %218 = vmatprep.subr.mxu0 0.0
    %219 = vmatpush2.msra.mxu0 0.0
    %220 = vmatprep.subr.mxu0 0.0
    %221 = vmatpush2.msra.mxu0 0.0
    %222 = vmatprep.subr.mxu0 0.0
    %223 = vmatpush2.msra.mxu0 0.0
    %224 = vmatprep.subr.mxu0 0.0
    %225 = vmatpush2.msra.mxu0 0.0
    %226 = vmatprep.subr.mxu0 0.0
    %227 = vmatpush2.msra.mxu0 0.0
    %228 = vmatprep.subr.mxu0 0.0
    %229 = vmatpush2.msra.mxu0 0.0
    %230 = vmatprep.subr.mxu0 0.0
    %231 = vmatpush2.msra.mxu0 0.0
    %232 = vmatprep.mubr.f32.mxu0 0.0
    %233 = vmatmul.mubr.f32.gmra.mxu0 %v138
    %v234 = vpop.f32.mrf.mxu0
    %v235 = vadd.f32 0.0, %v234
    %v236 = vpop.f32.mrf.mxu0
    %v237 = vadd.f32 0.0, %v236
    %238 = vmatprep.mubr.f32.mxu0 0.0
    %239 = vmatmul.mubr.f32.gmra.mxu0 %v141
    %v240 = vpop.f32.mrf.mxu0
    %v241 = vadd.f32 0.0, %v240
    %v242 = vpop.f32.mrf.mxu0
    %v243 = vadd.f32 0.0, %v242
    %244 = vdwg.mxu0
    %245 = vmatprep.subr.mxu0 0.0
    %246 = vmatpush1.msra.mxu0 0.0
    %247 = vmatprep.subr.mxu0 0.0
    %248 = vmatpush1.msra.mxu0 0.0
    %249 = vmatprep.subr.mxu0 0.0
    %250 = vmatpush1.msra.mxu0 0.0
    %251 = vmatprep.subr.mxu0 0.0
    %252 = vmatpush1.msra.mxu0 0.0
    %253 = vmatprep.subr.mxu0 0.0
    %254 = vmatpush1.msra.mxu0 0.0
    %255 = vmatprep.subr.mxu0 0.0
    %256 = vmatpush1.msra.mxu0 0.0
    %257 = vmatprep.subr.mxu0 0.0
    %258 = vmatpush1.msra.mxu0 0.0
    %259 = vmatprep.subr.mxu0 0.0
    %260 = vmatpush1.msra.mxu0 0.0
    %261 = vmatprep.subr.mxu0 0.0
    %262 = vmatpush1.msra.mxu0 0.0
    %263 = vmatprep.subr.mxu0 0.0
    %264 = vmatpush1.msra.mxu0 0.0
    %265 = vmatprep.subr.mxu0 0.0
    %266 = vmatpush1.msra.mxu0 0.0
    %267 = vmatprep.subr.mxu0 %v154
    %268 = vmatpush1.msra.mxu0 %v151
    %269 = vmatprep.subr.mxu0 %v123
    %270 = vmatpush1.msra.mxu0 %v122
    %271 = vmatprep.subr.mxu0 %v115
    %272 = vmatpush1.msra.mxu0 %v114
    %273 = vmatprep.subr.mxu0 %v107
    %274 = vmatpush1.msra.mxu0 %v106
    %275 = vmatprep.subr.mxu0 %v99
    %276 = vmatpush1.msra.mxu0 %v98
    %277 = vmatprep.subr.mxu0 0.0
    %278 = vmatpush2.msra.mxu0 0.0
    %279 = vmatprep.subr.mxu0 0.0
    %280 = vmatpush2.msra.mxu0 0.0
    %281 = vmatprep.subr.mxu0 0.0
    %282 = vmatpush2.msra.mxu0 0.0
    %283 = vmatprep.subr.mxu0 0.0
    %284 = vmatpush2.msra.mxu0 0.0
    %285 = vmatprep.subr.mxu0 0.0
    %286 = vmatpush2.msra.mxu0 0.0
    %287 = vmatprep.subr.mxu0 0.0
    %288 = vmatpush2.msra.mxu0 0.0
    %289 = vmatprep.subr.mxu0 0.0
    %290 = vmatpush2.msra.mxu0 0.0
    %291 = vmatprep.subr.mxu0 0.0
    %292 = vmatpush2.msra.mxu0 0.0
    %293 = vmatprep.subr.mxu0 0.0
    %294 = vmatpush2.msra.mxu0 0.0
    %295 = vmatprep.subr.mxu0 0.0
    %296 = vmatpush2.msra.mxu0 0.0
    %297 = vmatprep.subr.mxu0 0.0
    %298 = vmatpush2.msra.mxu0 0.0
    %299 = vmatprep.subr.mxu0 0.0
    %300 = vmatpush2.msra.mxu0 0.0
    %301 = vmatprep.subr.mxu0 0.0
    %302 = vmatpush2.msra.mxu0 0.0
    %303 = vmatprep.subr.mxu0 0.0
    %304 = vmatpush2.msra.mxu0 0.0
    %305 = vmatprep.subr.mxu0 0.0
    %306 = vmatpush2.msra.mxu0 0.0
    %307 = vmatprep.subr.mxu0 0.0
    %308 = vmatpush2.msra.mxu0 0.0
    %309 = vmatprep.mubr.f32.mxu0 0.0
    %310 = vmatmul.mubr.f32.gmra.mxu0 %v138
    %v311 = vpop.f32.mrf.mxu0
    %v312 = vadd.f32 0.0, %v311
    %v313 = vpop.f32.mrf.mxu0
    %v314 = vadd.f32 0.0, %v313
    %315 = vmatprep.mubr.f32.mxu0 0.0
    %316 = vmatmul.mubr.f32.gmra.mxu0 %v141
    %v317 = vpop.f32.mrf.mxu0
    %v318 = vadd.f32 0.0, %v317
    %v319 = vpop.f32.mrf.mxu0
    %v320 = vadd.f32 0.0, %v319
    %321 = vdwg.mxu0
    %322 = vmatprep.subr.mxu0 0.0
    %323 = vmatpush1.msra.mxu0 0.0
    %324 = vmatprep.subr.mxu0 0.0
    %325 = vmatpush1.msra.mxu0 0.0
    %326 = vmatprep.subr.mxu0 0.0
    %327 = vmatpush1.msra.mxu0 0.0
    %328 = vmatprep.subr.mxu0 0.0
    %329 = vmatpush1.msra.mxu0 0.0
    %330 = vmatprep.subr.mxu0 0.0
    %331 = vmatpush1.msra.mxu0 0.0
    %332 = vmatprep.subr.mxu0 0.0
    %333 = vmatpush1.msra.mxu0 0.0
    %334 = vmatprep.subr.mxu0 0.0
    %335 = vmatpush1.msra.mxu0 0.0
    %336 = vmatprep.subr.mxu0 0.0
    %337 = vmatpush1.msra.mxu0 0.0
    %338 = vmatprep.subr.mxu0 0.0
    %339 = vmatpush1.msra.mxu0 0.0
    %340 = vmatprep.subr.mxu0 0.0
    %341 = vmatpush1.msra.mxu0 0.0
    %342 = vmatprep.subr.mxu0 0.0
    %343 = vmatpush1.msra.mxu0 0.0
    %344 = vmatprep.subr.mxu0 %v160
    %345 = vmatpush1.msra.mxu0 %v157
    %346 = vmatprep.subr.mxu0 %v125
    %347 = vmatpush1.msra.mxu0 %v124
    %348 = vmatprep.subr.mxu0 %v117
    %349 = vmatpush1.msra.mxu0 %v116
    %350 = vmatprep.subr.mxu0 %v109
    %351 = vmatpush1.msra.mxu0 %v108
    %352 = vmatprep.subr.mxu0 %v101
    %353 = vmatpush1.msra.mxu0 %v100
    %354 = vmatprep.subr.mxu0 0.0
    %355 = vmatpush2.msra.mxu0 0.0
    %356 = vmatprep.subr.mxu0 0.0
    %357 = vmatpush2.msra.mxu0 0.0
    %358 = vmatprep.subr.mxu0 0.0
    %359 = vmatpush2.msra.mxu0 0.0
    %360 = vmatprep.subr.mxu0 0.0
    %361 = vmatpush2.msra.mxu0 0.0
    %362 = vmatprep.subr.mxu0 0.0
    %363 = vmatpush2.msra.mxu0 0.0
    %364 = vmatprep.subr.mxu0 0.0
    %365 = vmatpush2.msra.mxu0 0.0
    %366 = vmatprep.subr.mxu0 0.0
    %367 = vmatpush2.msra.mxu0 0.0
    %368 = vmatprep.subr.mxu0 0.0
    %369 = vmatpush2.msra.mxu0 0.0
    %370 = vmatprep.subr.mxu0 0.0
    %371 = vmatpush2.msra.mxu0 0.0
    %372 = vmatprep.subr.mxu0 0.0
    %373 = vmatpush2.msra.mxu0 0.0
    %374 = vmatprep.subr.mxu0 0.0
    %375 = vmatpush2.msra.mxu0 0.0
    %376 = vmatprep.subr.mxu0 0.0
    %377 = vmatpush2.msra.mxu0 0.0
    %378 = vmatprep.subr.mxu0 0.0
    %379 = vmatpush2.msra.mxu0 0.0
    %380 = vmatprep.subr.mxu0 0.0
    %381 = vmatpush2.msra.mxu0 0.0
    %382 = vmatprep.subr.mxu0 0.0
    %383 = vmatpush2.msra.mxu0 0.0
    %384 = vmatprep.subr.mxu0 0.0
    %385 = vmatpush2.msra.mxu0 0.0
    %386 = vmatprep.mubr.f32.mxu0 0.0
    %387 = vmatmul.mubr.f32.gmra.mxu0 %v138
    %v388 = vpop.f32.mrf.mxu0
    %v389 = vadd.f32 0.0, %v388
    %v390 = vpop.f32.mrf.mxu0
    %v391 = vadd.f32 0.0, %v390
    %392 = vmatprep.mubr.f32.mxu0 0.0
    %393 = vmatmul.mubr.f32.gmra.mxu0 %v141
    %v394 = vpop.f32.mrf.mxu0
    %v395 = vadd.f32 0.0, %v394
    %v396 = vpop.f32.mrf.mxu0
    %v397 = vadd.f32 0.0, %v396
    %398 = vdwg.mxu0
    %399 = vmatprep.subr.mxu0 0.0
    %400 = vmatpush1.msra.mxu0 0.0
    %401 = vmatprep.subr.mxu0 0.0
    %402 = vmatpush1.msra.mxu0 0.0
    %403 = vmatprep.subr.mxu0 0.0
    %404 = vmatpush1.msra.mxu0 0.0
    %405 = vmatprep.subr.mxu0 0.0
    %406 = vmatpush1.msra.mxu0 0.0
    %407 = vmatprep.subr.mxu0 0.0
    %408 = vmatpush1.msra.mxu0 0.0
    %409 = vmatprep.subr.mxu0 0.0
    %410 = vmatpush1.msra.mxu0 0.0
    %411 = vmatprep.subr.mxu0 0.0
    %412 = vmatpush1.msra.mxu0 0.0
    %413 = vmatprep.subr.mxu0 0.0
    %414 = vmatpush1.msra.mxu0 0.0
    %415 = vmatprep.subr.mxu0 0.0
    %416 = vmatpush1.msra.mxu0 0.0
    %417 = vmatprep.subr.mxu0 0.0
    %418 = vmatpush1.msra.mxu0 0.0
    %419 = vmatprep.subr.mxu0 0.0
    %420 = vmatpush1.msra.mxu0 0.0
    %421 = vmatprep.subr.mxu0 %v166
    %422 = vmatpush1.msra.mxu0 %v163
    %423 = vmatprep.subr.mxu0 %v127
    %424 = vmatpush1.msra.mxu0 %v126
    %425 = vmatprep.subr.mxu0 %v119
    %426 = vmatpush1.msra.mxu0 %v118
    %427 = vmatprep.subr.mxu0 %v111
    %428 = vmatpush1.msra.mxu0 %v110
    %429 = vmatprep.subr.mxu0 %v103
    %430 = vmatpush1.msra.mxu0 %v102
    %431 = vmatprep.subr.mxu0 0.0
    %432 = vmatpush2.msra.mxu0 0.0
    %433 = vmatprep.subr.mxu0 0.0
    %434 = vmatpush2.msra.mxu0 0.0
    %435 = vmatprep.subr.mxu0 0.0
    %436 = vmatpush2.msra.mxu0 0.0
    %437 = vmatprep.subr.mxu0 0.0
    %438 = vmatpush2.msra.mxu0 0.0
    %439 = vmatprep.subr.mxu0 0.0
    %440 = vmatpush2.msra.mxu0 0.0
    %441 = vmatprep.subr.mxu0 0.0
    %442 = vmatpush2.msra.mxu0 0.0
    %443 = vmatprep.subr.mxu0 0.0
    %444 = vmatpush2.msra.mxu0 0.0
    %445 = vmatprep.subr.mxu0 0.0
    %446 = vmatpush2.msra.mxu0 0.0
    %447 = vmatprep.subr.mxu0 0.0
    %448 = vmatpush2.msra.mxu0 0.0
    %449 = vmatprep.subr.mxu0 0.0
    %450 = vmatpush2.msra.mxu0 0.0
    %451 = vmatprep.subr.mxu0 0.0
    %452 = vmatpush2.msra.mxu0 0.0
    %453 = vmatprep.subr.mxu0 0.0
    %454 = vmatpush2.msra.mxu0 0.0
    %455 = vmatprep.subr.mxu0 0.0
    %456 = vmatpush2.msra.mxu0 0.0
    %457 = vmatprep.subr.mxu0 0.0
    %458 = vmatpush2.msra.mxu0 0.0
    %459 = vmatprep.subr.mxu0 0.0
    %460 = vmatpush2.msra.mxu0 0.0
    %461 = vmatprep.subr.mxu0 0.0
    %462 = vmatpush2.msra.mxu0 0.0
    %463 = vmatprep.mubr.f32.mxu0 0.0
    %464 = vmatmul.mubr.f32.gmra.mxu0 %v138
    %v465 = vpop.f32.mrf.mxu0
    %v466 = vadd.f32 0.0, %v465
    %v467 = vpop.f32.mrf.mxu0
    %v468 = vadd.f32 0.0, %v467
    %469 = vmatprep.mubr.f32.mxu0 0.0
    %470 = vmatmul.mubr.f32.gmra.mxu0 %v141
    %v471 = vpop.f32.mrf.mxu0
    %v472 = vadd.f32 0.0, %v471
    %v473 = vpop.f32.mrf.mxu0
    %v474 = vadd.f32 0.0, %v473
    %475 = vdwg.mxu0
    %v476 = vmax.f32 %v235, 0.0
    %v477 = vmax.f32 %v237, 0.0
    %v478 = vmax.f32 %v312, 0.0
    %v479 = vmax.f32 %v314, 0.0
    %v480 = vmax.f32 %v389, 0.0
    %v481 = vmax.f32 %v391, 0.0
    %v482 = vmax.f32 %v466, 0.0
    %v483 = vmax.f32 %v468, 0.0
    %v484 = vmax.f32 %v241, 0.0
    %v485 = vmax.f32 %v243, 0.0
    %v486 = vmax.f32 %v318, 0.0
    %v487 = vmax.f32 %v320, 0.0
    %v488 = vmax.f32 %v395, 0.0
    %v489 = vmax.f32 %v397, 0.0
    %v490 = vmax.f32 %v472, 0.0
    %v491 = vmax.f32 %v474, 0.0
    %vm492 = vcmask 785408
    %493 = vst.msk [vmem:[#allocation2] sm:$0xff] %vm492, 0.0
    %494 = vst.msk [vmem:[#allocation2 + $0x8] sm:$0xff] %vm492, 0.0
    %495 = vst.msk [vmem:[#allocation2 + $0x10] sm:$0xff] %vm492, 0.0
    %496 = vst.msk [vmem:[#allocation2 + $0x18] sm:$0xff] %vm492, 0.0
    %497 = vst.msk [vmem:[#allocation2 + $0x20] sm:$0xff] %vm492, 0.0
    %498 = vst.msk [vmem:[#allocation2 + $0x28] sm:$0xff] %vm492, 0.0
    %499 = vst.msk [vmem:[#allocation2 + $0x30] sm:$0xff] %vm492, 0.0
    %500 = vst.msk [vmem:[#allocation2 + $0x38] sm:$0xff] %vm492, 0.0
    %501 = vst.msk [vmem:[#allocation2 + $0x40] sm:$0xff] %vm492, 0.0
    %502 = vst.msk [vmem:[#allocation2 + $0x48] sm:$0xff] %vm492, 0.0
    %503 = vst.msk [vmem:[#allocation2 + $0x50] sm:$0xff] %vm492, 0.0
    %504 = vst.msk [vmem:[#allocation2 + $0x58] sm:$0xff] %vm492, 0.0
    %505 = vst.msk [vmem:[#allocation2 + $0x60] sm:$0xff] %vm492, 0.0
    %506 = vst.msk [vmem:[#allocation2 + $0x68] sm:$0xff] %vm492, 0.0
    %507 = vst.msk [vmem:[#allocation2 + $0x70] sm:$0xff] %vm492, 0.0
    %508 = vst.msk [vmem:[#allocation2 + $0x78] sm:$0xff] %vm492, 0.0
    %509 = vst.msk [vmem:[#allocation2 + $0x80] sm:$0xff] %vm492, 0.0
    %510 = vst.msk [vmem:[#allocation2 + $0x88] sm:$0xff] %vm492, 0.0
    %511 = vst.msk [vmem:[#allocation2 + $0x90] sm:$0xff] %vm492, 0.0
    %512 = vst.msk [vmem:[#allocation2 + $0x98] sm:$0xff] %vm492, 0.0
    %513 = vst.msk [vmem:[#allocation2 + $0xa0] sm:$0xff] %vm492, 0.0
    %514 = vst.msk [vmem:[#allocation2 + $0xa8] sm:$0xff] %vm492, 0.0
    %515 = vst.msk [vmem:[#allocation2 + $0xb0] sm:$0xff] %vm492, 0.0
    %516 = vst.msk [vmem:[#allocation2 + $0xb8] sm:$0xff] %vm492, 0.0
    %517 = vst.msk [vmem:[#allocation2 + $0xc0] sm:$0xff] %vm492, 0.0
    %518 = vst.msk [vmem:[#allocation2 + $0xc8] sm:$0xff] %vm492, 0.0
    %519 = vst.msk [vmem:[#allocation2 + $0xd0] sm:$0xff] %vm492, 0.0
    %520 = vst.msk [vmem:[#allocation2 + $0xd8] sm:$0xff] %vm492, 0.0
    %521 = vst.msk [vmem:[#allocation2 + $0xe0] sm:$0xff] %vm492, 0.0
    %522 = vst.msk [vmem:[#allocation2 + $0xe8] sm:$0xff] %vm492, 0.0
    %523 = vst.msk [vmem:[#allocation2 + $0xf0] sm:$0xff] %vm492, 0.0
    %524 = vst.msk [vmem:[#allocation2 + $0xf8] sm:$0xff] %vm492, 0.0
    %525 = vst.msk [vmem:[#allocation2 + $0x100] sm:$0xff] %vm492, 0.0
    %526 = vst.msk [vmem:[#allocation2 + $0x108] sm:$0xff] %vm492, 0.0
    %527 = vst.msk [vmem:[#allocation2 + $0x110] sm:$0xff] %vm492, 0.0
    %528 = vst.msk [vmem:[#allocation2 + $0x118] sm:$0xff] %vm492, 0.0
    %529 = vst.msk [vmem:[#allocation2 + $0x120] sm:$0xff] %vm492, 0.0
    %530 = vst.msk [vmem:[#allocation2 + $0x128] sm:$0xff] %vm492, 0.0
    %531 = vst.msk [vmem:[#allocation2 + $0x130] sm:$0xff] %vm492, 0.0
    %532 = vst.msk [vmem:[#allocation2 + $0x138] sm:$0xff] %vm492, 0.0
    %533 = vst.msk [vmem:[#allocation2 + $0x140] sm:$0xff] %vm492, 0.0
    %534 = vst.msk [vmem:[#allocation2 + $0x148] sm:$0xff] %vm492, 0.0
    %535 = vst.msk [vmem:[#allocation2 + $0x150] sm:$0xff] %vm492, 0.0
    %536 = vst.msk [vmem:[#allocation2 + $0x158] sm:$0xff] %vm492, 0.0
    %537 = vst.msk [vmem:[#allocation2 + $0x160] sm:$0xff] %vm492, 0.0
    %538 = vst.msk [vmem:[#allocation2 + $0x168] sm:$0xff] %vm492, 0.0
    %539 = vst.msk [vmem:[#allocation2 + $0x170] sm:$0xff] %vm492, 0.0
    %540 = vst.msk [vmem:[#allocation2 + $0x178] sm:$0xff] %vm492, 0.0
    %541 = vst.msk [vmem:[#allocation2 + $0x180] sm:$0xff] %vm492, 0.0
    %542 = vst.msk [vmem:[#allocation2 + $0x188] sm:$0xff] %vm492, 0.0
    %543 = vst.msk [vmem:[#allocation2 + $0x190] sm:$0xff] %vm492, 0.0
    %544 = vst.msk [vmem:[#allocation2 + $0x198] sm:$0xff] %vm492, 0.0
    %545 = vst.msk [vmem:[#allocation2 + $0x1a0] sm:$0xff] %vm492, 0.0
    %546 = vst.msk [vmem:[#allocation2 + $0x1a8] sm:$0xff] %vm492, 0.0
    %547 = vst.msk [vmem:[#allocation2 + $0x1b0] sm:$0xff] %vm492, 0.0
    %548 = vst.msk [vmem:[#allocation2 + $0x1b8] sm:$0xff] %vm492, 0.0
    %549 = vst.msk [vmem:[#allocation2 + $0x1c0] sm:$0xff] %vm492, 0.0
    %550 = vst.msk [vmem:[#allocation2 + $0x1c8] sm:$0xff] %vm492, 0.0
    %551 = vst.msk [vmem:[#allocation2 + $0x1d0] sm:$0xff] %vm492, 0.0
    %552 = vst.msk [vmem:[#allocation2 + $0x1d8] sm:$0xff] %vm492, 0.0
    %vm553 = vcmask 261120
    %554 = vst.msk [vmem:[#allocation2] sm:$0xff] %vm553, %v476
    %555 = vst.msk [vmem:[#allocation2 + $0x8] sm:$0xff] %vm553, %v484
    %558 = vrot.lane.b32.xlu0 %v476, 96
    %v559 = vpop.permute.xlu0 %558
    %560 = vrot.lane.b32.xlu0 %v484, 96
    %v561 = vpop.permute.xlu0 %560
    %564 = vst.msk [vmem:[#allocation2 + $0x10] sm:$0xff] %vm553, %v559
    %565 = vst.msk [vmem:[#allocation2 + $0x18] sm:$0xff] %vm553, %v561
    %566 = vrot.lane.b32.xlu0 %v476, 64
    %v567 = vpop.permute.xlu0 %566
    %568 = vrot.lane.b32.xlu0 %v484, 64
    %v569 = vpop.permute.xlu0 %568
    %572 = vst.msk [vmem:[#allocation2 + $0x20] sm:$0xff] %vm553, %v567
    %573 = vst.msk [vmem:[#allocation2 + $0x28] sm:$0xff] %vm553, %v569
    %574 = vrot.lane.b32.xlu0 %v476, 32
    %v575 = vpop.permute.xlu0 %574
    %576 = vrot.lane.b32.xlu0 %v484, 32
    %v577 = vpop.permute.xlu0 %576
    %580 = vst.msk [vmem:[#allocation2 + $0x30] sm:$0xff] %vm553, %v575
    %581 = vst.msk [vmem:[#allocation2 + $0x38] sm:$0xff] %vm553, %v577
    %582 = vst.msk [vmem:[#allocation2 + $0x40] sm:$0xff] %vm553, %v477
    %583 = vst.msk [vmem:[#allocation2 + $0x48] sm:$0xff] %vm553, %v485
    %586 = vrot.lane.b32.xlu0 %v477, 96
    %v587 = vpop.permute.xlu0 %586
    %588 = vrot.lane.b32.xlu0 %v485, 96
    %v589 = vpop.permute.xlu0 %588
    %592 = vst.msk [vmem:[#allocation2 + $0x50] sm:$0xff] %vm553, %v587
    %593 = vst.msk [vmem:[#allocation2 + $0x58] sm:$0xff] %vm553, %v589
    %594 = vrot.lane.b32.xlu0 %v477, 64
    %v595 = vpop.permute.xlu0 %594
    %596 = vrot.lane.b32.xlu0 %v485, 64
    %v597 = vpop.permute.xlu0 %596
    %600 = vst.msk [vmem:[#allocation2 + $0x60] sm:$0xff] %vm553, %v595
    %601 = vst.msk [vmem:[#allocation2 + $0x68] sm:$0xff] %vm553, %v597
    %602 = vrot.lane.b32.xlu0 %v477, 32
    %v603 = vpop.permute.xlu0 %602
    %604 = vrot.lane.b32.xlu0 %v485, 32
    %v605 = vpop.permute.xlu0 %604
    %608 = vst.msk [vmem:[#allocation2 + $0x70] sm:$0xff] %vm553, %v603
    %609 = vst.msk [vmem:[#allocation2 + $0x78] sm:$0xff] %vm553, %v605
    %610 = vst.msk [vmem:[#allocation2 + $0x80] sm:$0xff] %vm553, %v478
    %611 = vst.msk [vmem:[#allocation2 + $0x88] sm:$0xff] %vm553, %v486
    %614 = vrot.lane.b32.xlu0 %v478, 96
    %v615 = vpop.permute.xlu0 %614
    %616 = vrot.lane.b32.xlu0 %v486, 96
    %v617 = vpop.permute.xlu0 %616
    %620 = vst.msk [vmem:[#allocation2 + $0x90] sm:$0xff] %vm553, %v615
    %621 = vst.msk [vmem:[#allocation2 + $0x98] sm:$0xff] %vm553, %v617
    %vm622 = vcmask 523520
    %623 = vst.msk [vmem:[#allocation2 + $0xa0] sm:$0xff] %vm622, %v615
    %624 = vst.msk [vmem:[#allocation2 + $0xa8] sm:$0xff] %vm622, %v617
    %625 = vrot.lane.b32.xlu0 %v478, 64
    %v626 = vpop.permute.xlu0 %625
    %627 = vrot.lane.b32.xlu0 %v486, 64
    %v628 = vpop.permute.xlu0 %627
    %631 = vst.msk [vmem:[#allocation2 + $0xb0] sm:$0xff] %vm622, %v626
    %632 = vst.msk [vmem:[#allocation2 + $0xb8] sm:$0xff] %vm622, %v628
    %635 = vrot.lane.b32.xlu0 %v479, 32
    %v636 = vpop.permute.xlu0 %635
    %637 = vrot.lane.b32.xlu0 %v487, 32
    %v638 = vpop.permute.xlu0 %637
    %641 = vst.msk [vmem:[#allocation2 + $0xc0] sm:$0xff] %vm622, %v636
    %642 = vst.msk [vmem:[#allocation2 + $0xc8] sm:$0xff] %vm622, %v638
    %643 = vst.msk [vmem:[#allocation2 + $0xd0] sm:$0xff] %vm622, %v479
    %644 = vst.msk [vmem:[#allocation2 + $0xd8] sm:$0xff] %vm622, %v487
    %645 = vrot.lane.b32.xlu0 %v479, 96
    %v646 = vpop.permute.xlu0 %645
    %647 = vrot.lane.b32.xlu0 %v487, 96
    %v648 = vpop.permute.xlu0 %647
    %651 = vst.msk [vmem:[#allocation2 + $0xe0] sm:$0xff] %vm622, %v646
    %652 = vst.msk [vmem:[#allocation2 + $0xe8] sm:$0xff] %vm622, %v648
    %653 = vrot.lane.b32.xlu0 %v479, 64
    %v654 = vpop.permute.xlu0 %653
    %655 = vrot.lane.b32.xlu0 %v487, 64
    %v656 = vpop.permute.xlu0 %655
    %659 = vst.msk [vmem:[#allocation2 + $0xf0] sm:$0xff] %vm622, %v654
    %660 = vst.msk [vmem:[#allocation2 + $0xf8] sm:$0xff] %vm622, %v656
    %663 = vrot.lane.b32.xlu0 %v480, 32
    %v664 = vpop.permute.xlu0 %663
    %665 = vrot.lane.b32.xlu0 %v488, 32
    %v666 = vpop.permute.xlu0 %665
    %669 = vst.msk [vmem:[#allocation2 + $0x100] sm:$0xff] %vm622, %v664
    %670 = vst.msk [vmem:[#allocation2 + $0x108] sm:$0xff] %vm622, %v666
    %671 = vst.msk [vmem:[#allocation2 + $0x110] sm:$0xff] %vm622, %v480
    %672 = vst.msk [vmem:[#allocation2 + $0x118] sm:$0xff] %vm622, %v488
    %673 = vrot.lane.b32.xlu0 %v480, 96
    %v674 = vpop.permute.xlu0 %673
    %675 = vrot.lane.b32.xlu0 %v488, 96
    %v676 = vpop.permute.xlu0 %675
    %679 = vst.msk [vmem:[#allocation2 + $0x120] sm:$0xff] %vm622, %v674
    %680 = vst.msk [vmem:[#allocation2 + $0x128] sm:$0xff] %vm622, %v676
    %681 = vrot.lane.b32.xlu0 %v480, 64
    %v682 = vpop.permute.xlu0 %681
    %683 = vrot.lane.b32.xlu0 %v488, 64
    %v684 = vpop.permute.xlu0 %683
    %687 = vst.msk [vmem:[#allocation2 + $0x130] sm:$0xff] %vm622, %v682
    %688 = vst.msk [vmem:[#allocation2 + $0x138] sm:$0xff] %vm622, %v684
    %691 = vrot.lane.b32.xlu0 %v481, 64
    %v692 = vpop.permute.xlu0 %691
    %693 = vrot.lane.b32.xlu0 %v489, 64
    %v694 = vpop.permute.xlu0 %693
    %vm697 = vcmask 785920
    %698 = vst.msk [vmem:[#allocation2 + $0x140] sm:$0xff] %vm697, %v692
    %699 = vst.msk [vmem:[#allocation2 + $0x148] sm:$0xff] %vm697, %v694
    %700 = vrot.lane.b32.xlu0 %v481, 32
    %v701 = vpop.permute.xlu0 %700
    %702 = vrot.lane.b32.xlu0 %v489, 32
    %v703 = vpop.permute.xlu0 %702
    %706 = vst.msk [vmem:[#allocation2 + $0x150] sm:$0xff] %vm697, %v701
    %707 = vst.msk [vmem:[#allocation2 + $0x158] sm:$0xff] %vm697, %v703
    %708 = vst.msk [vmem:[#allocation2 + $0x160] sm:$0xff] %vm697, %v481
    %709 = vst.msk [vmem:[#allocation2 + $0x168] sm:$0xff] %vm697, %v489
    %710 = vrot.lane.b32.xlu0 %v481, 96
    %v711 = vpop.permute.xlu0 %710
    %712 = vrot.lane.b32.xlu0 %v489, 96
    %v713 = vpop.permute.xlu0 %712
    %716 = vst.msk [vmem:[#allocation2 + $0x170] sm:$0xff] %vm697, %v711
    %717 = vst.msk [vmem:[#allocation2 + $0x178] sm:$0xff] %vm697, %v713
    %720 = vrot.lane.b32.xlu0 %v482, 64
    %v721 = vpop.permute.xlu0 %720
    %722 = vrot.lane.b32.xlu0 %v490, 64
    %v723 = vpop.permute.xlu0 %722
    %726 = vst.msk [vmem:[#allocation2 + $0x180] sm:$0xff] %vm697, %v721
    %727 = vst.msk [vmem:[#allocation2 + $0x188] sm:$0xff] %vm697, %v723
    %728 = vrot.lane.b32.xlu0 %v482, 32
    %v729 = vpop.permute.xlu0 %728
    %730 = vrot.lane.b32.xlu0 %v490, 32
    %v731 = vpop.permute.xlu0 %730
    %734 = vst.msk [vmem:[#allocation2 + $0x190] sm:$0xff] %vm697, %v729
    %735 = vst.msk [vmem:[#allocation2 + $0x198] sm:$0xff] %vm697, %v731
    %736 = vst.msk [vmem:[#allocation2 + $0x1a0] sm:$0xff] %vm697, %v482
    %737 = vst.msk [vmem:[#allocation2 + $0x1a8] sm:$0xff] %vm697, %v490
    %738 = vrot.lane.b32.xlu0 %v482, 96
    %v739 = vpop.permute.xlu0 %738
    %740 = vrot.lane.b32.xlu0 %v490, 96
    %v741 = vpop.permute.xlu0 %740
    %744 = vst.msk [vmem:[#allocation2 + $0x1b0] sm:$0xff] %vm697, %v739
    %745 = vst.msk [vmem:[#allocation2 + $0x1b8] sm:$0xff] %vm697, %v741
    %748 = vrot.lane.b32.xlu0 %v483, 64
    %v749 = vpop.permute.xlu0 %748
    %750 = vrot.lane.b32.xlu0 %v491, 64
    %v751 = vpop.permute.xlu0 %750
    %754 = vst.msk [vmem:[#allocation2 + $0x1c0] sm:$0xff] %vm697, %v749
    %755 = vst.msk [vmem:[#allocation2 + $0x1c8] sm:$0xff] %vm697, %v751
    %756 = vrot.lane.b32.xlu0 %v483, 32
    %v757 = vpop.permute.xlu0 %756
    %758 = vrot.lane.b32.xlu0 %v491, 32
    %v759 = vpop.permute.xlu0 %758
    %762 = vst.msk [vmem:[#allocation2 + $0x1d0] sm:$0xff] %vm697, %v757
    %763 = vst.msk [vmem:[#allocation2 + $0x1d8] sm:$0xff] %vm697, %v759
    %v764 = vld [vmem:[#allocation12] sm:$0xff]
    %v765 = vld [vmem:[#allocation12 + $0x8] sm:$0xff]
    %v766 = vld [vmem:[#allocation12 + $0x10] sm:$0xff]
    %v767 = vld [vmem:[#allocation12 + $0x18] sm:$0xff]
    %v768 = vld [vmem:[#allocation12 + $0x20] sm:$0xff]
    %v769 = vld [vmem:[#allocation12 + $0x28] sm:$0xff]
    %v770 = vld [vmem:[#allocation12 + $0x30] sm:$0xff]
    %v771 = vld [vmem:[#allocation12 + $0x38] sm:$0xff]
    %v772 = vld [vmem:[#allocation12 + $0x40] sm:$0xf]
    %v773 = vld [vmem:[#allocation12 + $0x48] sm:$0xf]
    %v774 = vld [vmem:[#allocation12 + $0x50] sm:$0xf]
    %v775 = vld [vmem:[#allocation12 + $0x58] sm:$0xf]
    %v776 = vld [vmem:[#allocation2] sm:$0xff]
    %v777 = vld [vmem:[#allocation2 + $0x8] sm:$0xff]
    %v778 = vld [vmem:[#allocation2 + $0x10] sm:$0xff]
    %v779 = vld [vmem:[#allocation2 + $0x18] sm:$0xff]
    %v780 = vld [vmem:[#allocation2 + $0x20] sm:$0xff]
    %v781 = vld [vmem:[#allocation2 + $0x28] sm:$0xff]
    %v782 = vld [vmem:[#allocation2 + $0x30] sm:$0xff]
    %v783 = vld [vmem:[#allocation2 + $0x38] sm:$0xff]
    %v784 = vld [vmem:[#allocation2 + $0x40] sm:$0xff]
    %v785 = vld [vmem:[#allocation2 + $0x48] sm:$0xff]
    %v786 = vld [vmem:[#allocation2 + $0x50] sm:$0xff]
    %v787 = vld [vmem:[#allocation2 + $0x58] sm:$0xff]
    %v788 = vld [vmem:[#allocation2 + $0x60] sm:$0xff]
    %v789 = vld [vmem:[#allocation2 + $0x68] sm:$0xff]
    %v790 = vld [vmem:[#allocation2 + $0x70] sm:$0xff]
    %v791 = vld [vmem:[#allocation2 + $0x78] sm:$0xff]
    %v792 = vld [vmem:[#allocation2 + $0x80] sm:$0xff]
    %v793 = vld [vmem:[#allocation2 + $0x88] sm:$0xff]
    %v794 = vld [vmem:[#allocation2 + $0x90] sm:$0xff]
    %v795 = vld [vmem:[#allocation2 + $0x98] sm:$0xff]
    %v796 = vld [vmem:[#allocation2 + $0xa0] sm:$0xff]
    %v797 = vld [vmem:[#allocation2 + $0xa8] sm:$0xff]
    %v798 = vld [vmem:[#allocation2 + $0xb0] sm:$0xff]
    %v799 = vld [vmem:[#allocation2 + $0xb8] sm:$0xff]
    %v800 = vld [vmem:[#allocation2 + $0xc0] sm:$0xff]
    %v801 = vld [vmem:[#allocation2 + $0xc8] sm:$0xff]
    %v802 = vld [vmem:[#allocation2 + $0xd0] sm:$0xff]
    %v803 = vld [vmem:[#allocation2 + $0xd8] sm:$0xff]
    %v804 = vld [vmem:[#allocation2 + $0xe0] sm:$0xff]
    %v805 = vld [vmem:[#allocation2 + $0xe8] sm:$0xff]
    %v806 = vld [vmem:[#allocation2 + $0xf0] sm:$0xff]
    %v807 = vld [vmem:[#allocation2 + $0xf8] sm:$0xff]
    %v808 = vld [vmem:[#allocation2 + $0x100] sm:$0xff]
    %v809 = vld [vmem:[#allocation2 + $0x108] sm:$0xff]
    %v810 = vld [vmem:[#allocation2 + $0x110] sm:$0xff]
    %v811 = vld [vmem:[#allocation2 + $0x118] sm:$0xff]
    %v812 = vld [vmem:[#allocation2 + $0x120] sm:$0xff]
    %v813 = vld [vmem:[#allocation2 + $0x128] sm:$0xff]
    %v814 = vld [vmem:[#allocation2 + $0x130] sm:$0xff]
    %v815 = vld [vmem:[#allocation2 + $0x138] sm:$0xff]
    %v816 = vld [vmem:[#allocation2 + $0x140] sm:$0xff]
    %v817 = vld [vmem:[#allocation2 + $0x148] sm:$0xff]
    %v818 = vld [vmem:[#allocation2 + $0x150] sm:$0xff]
    %v819 = vld [vmem:[#allocation2 + $0x158] sm:$0xff]
    %v820 = vld [vmem:[#allocation2 + $0x160] sm:$0xff]
    %v821 = vld [vmem:[#allocation2 + $0x168] sm:$0xff]
    %v822 = vld [vmem:[#allocation2 + $0x170] sm:$0xff]
    %v823 = vld [vmem:[#allocation2 + $0x178] sm:$0xff]
    %v824 = vld [vmem:[#allocation2 + $0x180] sm:$0xff]
    %v825 = vld [vmem:[#allocation2 + $0x188] sm:$0xff]
    %v826 = vld [vmem:[#allocation2 + $0x190] sm:$0xff]
    %v827 = vld [vmem:[#allocation2 + $0x198] sm:$0xff]
    %v828 = vld [vmem:[#allocation2 + $0x1a0] sm:$0xff]
    %v829 = vld [vmem:[#allocation2 + $0x1a8] sm:$0xff]
    %v830 = vld [vmem:[#allocation2 + $0x1b0] sm:$0xff]
    %v831 = vld [vmem:[#allocation2 + $0x1b8] sm:$0xff]
    %v832 = vld [vmem:[#allocation2 + $0x1c0] sm:$0xff]
    %v833 = vld [vmem:[#allocation2 + $0x1c8] sm:$0xff]
    %v834 = vld [vmem:[#allocation2 + $0x1d0] sm:$0xff]
    %v835 = vld [vmem:[#allocation2 + $0x1d8] sm:$0xff]
    %v836 = vld [vmem:[#allocation13] sm:$0xff]
    %v837 = vld [vmem:[#allocation13 + $0x8] sm:$0xff]
    %v838 = vld [vmem:[#allocation13 + $0x10] sm:$0xf]
    %v840 = vsel %vm492, %v767, 0
    %v843 = vsel %vm492, %v771, 0
    %v846 = vsel %vm492, %v775, 0
    %848 = vmatprep.subr.mxu0 0.0
    %849 = vmatpush1.msra.mxu0 %v791
    %850 = vmatprep.subr.mxu0 0.0
    %851 = vmatpush1.msra.mxu0 %v790
    %852 = vmatprep.subr.mxu0 0.0
    %853 = vmatpush1.msra.mxu0 %v789
    %854 = vmatprep.subr.mxu0 0.0
    %855 = vmatpush1.msra.mxu0 %v788
    %856 = vmatprep.subr.mxu0 0.0
    %857 = vmatpush1.msra.mxu0 %v787
    %858 = vmatprep.subr.mxu0 0.0
    %859 = vmatpush1.msra.mxu0 %v786
    %860 = vmatprep.subr.mxu0 0.0
    %861 = vmatpush1.msra.mxu0 %v785
    %862 = vmatprep.subr.mxu0 0.0
    %863 = vmatpush1.msra.mxu0 %v784
    %864 = vmatprep.subr.mxu0 0.0
    %865 = vmatpush1.msra.mxu0 %v783
    %866 = vmatprep.subr.mxu0 0.0
    %867 = vmatpush1.msra.mxu0 %v782
    %868 = vmatprep.subr.mxu0 0.0
    %869 = vmatpush1.msra.mxu0 %v781
    %870 = vmatprep.subr.mxu0 0.0
    %871 = vmatpush1.msra.mxu0 %v780
    %872 = vmatprep.subr.mxu0 0.0
    %873 = vmatpush1.msra.mxu0 %v779
    %874 = vmatprep.subr.mxu0 0.0
    %875 = vmatpush1.msra.mxu0 %v778
    %876 = vmatprep.subr.mxu0 0.0
    %877 = vmatpush1.msra.mxu0 %v777
    %878 = vmatprep.subr.mxu0 0.0
    %879 = vmatpush1.msra.mxu0 %v776
    %880 = vmatprep.subr.mxu0 0.0
    %881 = vmatpush2.msra.mxu0 %v807
    %882 = vmatprep.subr.mxu0 0.0
    %883 = vmatpush2.msra.mxu0 %v806
    %884 = vmatprep.subr.mxu0 0.0
    %885 = vmatpush2.msra.mxu0 %v805
    %886 = vmatprep.subr.mxu0 0.0
    %887 = vmatpush2.msra.mxu0 %v804
    %888 = vmatprep.subr.mxu0 0.0
    %889 = vmatpush2.msra.mxu0 %v803
    %890 = vmatprep.subr.mxu0 0.0
    %891 = vmatpush2.msra.mxu0 %v802
    %892 = vmatprep.subr.mxu0 0.0
    %893 = vmatpush2.msra.mxu0 %v801
    %894 = vmatprep.subr.mxu0 0.0
    %895 = vmatpush2.msra.mxu0 %v800
    %896 = vmatprep.subr.mxu0 0.0
    %897 = vmatpush2.msra.mxu0 %v799
    %898 = vmatprep.subr.mxu0 0.0
    %899 = vmatpush2.msra.mxu0 %v798
    %900 = vmatprep.subr.mxu0 0.0
    %901 = vmatpush2.msra.mxu0 %v797
    %902 = vmatprep.subr.mxu0 0.0
    %903 = vmatpush2.msra.mxu0 %v796
    %904 = vmatprep.subr.mxu0 0.0
    %905 = vmatpush2.msra.mxu0 %v795
    %906 = vmatprep.subr.mxu0 0.0
    %907 = vmatpush2.msra.mxu0 %v794
    %908 = vmatprep.subr.mxu0 0.0
    %909 = vmatpush2.msra.mxu0 %v793
    %910 = vmatprep.subr.mxu0 0.0
    %911 = vmatpush2.msra.mxu0 %v792
    %912 = vmatprep.mubr.f32.mxu0 %v765
    %913 = vmatmul.mubr.f32.gmra.mxu0 %v764
    %v914 = vpop.f32.mrf.mxu0
    %v915 = vadd.f32 %v836, %v914
    %v916 = vpop.f32.mrf.mxu0
    %917 = vmatprep.mubr.f32.mxu0 %v769
    %918 = vmatmul.mubr.f32.gmra.mxu0 %v768
    %v919 = vpop.f32.mrf.mxu0
    %v920 = vadd.f32 %v837, %v919
    %v921 = vpop.f32.mrf.mxu0
    %922 = vmatprep.mubr.f32.mxu0 %v773
    %923 = vmatmul.mubr.f32.gmra.mxu0 %v772
    %v924 = vpop.f32.mrf.mxu0
    %v925 = vadd.f32 %v838, %v924
    %v926 = vpop.f32.mrf.mxu0
    %927 = vdwg.mxu0
    %928 = vmatprep.subr.mxu0 0.0
    %929 = vmatpush1.msra.mxu0 %v823
    %930 = vmatprep.subr.mxu0 0.0
    %931 = vmatpush1.msra.mxu0 %v822
    %932 = vmatprep.subr.mxu0 0.0
    %933 = vmatpush1.msra.mxu0 %v821
    %934 = vmatprep.subr.mxu0 0.0
    %935 = vmatpush1.msra.mxu0 %v820
    %936 = vmatprep.subr.mxu0 0.0
    %937 = vmatpush1.msra.mxu0 %v819
    %938 = vmatprep.subr.mxu0 0.0
    %939 = vmatpush1.msra.mxu0 %v818
    %940 = vmatprep.subr.mxu0 0.0
    %941 = vmatpush1.msra.mxu0 %v817
    %942 = vmatprep.subr.mxu0 0.0
    %943 = vmatpush1.msra.mxu0 %v816
    %944 = vmatprep.subr.mxu0 0.0
    %945 = vmatpush1.msra.mxu0 %v815
    %946 = vmatprep.subr.mxu0 0.0
    %947 = vmatpush1.msra.mxu0 %v814
    %948 = vmatprep.subr.mxu0 0.0
    %949 = vmatpush1.msra.mxu0 %v813
    %950 = vmatprep.subr.mxu0 0.0
    %951 = vmatpush1.msra.mxu0 %v812
    %952 = vmatprep.subr.mxu0 0.0
    %953 = vmatpush1.msra.mxu0 %v811
    %954 = vmatprep.subr.mxu0 0.0
    %955 = vmatpush1.msra.mxu0 %v810
    %956 = vmatprep.subr.mxu0 0.0
    %957 = vmatpush1.msra.mxu0 %v809
    %958 = vmatprep.subr.mxu0 0.0
    %959 = vmatpush1.msra.mxu0 %v808
    %960 = vmatprep.subr.mxu0 0.0
    %961 = vmatpush2.msra.mxu0 0.0
    %962 = vmatprep.subr.mxu0 0.0
    %963 = vmatpush2.msra.mxu0 0.0
    %964 = vmatprep.subr.mxu0 0.0
    %965 = vmatpush2.msra.mxu0 0.0
    %966 = vmatprep.subr.mxu0 0.0
    %967 = vmatpush2.msra.mxu0 0.0
    %968 = vmatprep.subr.mxu0 0.0
    %969 = vmatpush2.msra.mxu0 %v835
    %970 = vmatprep.subr.mxu0 0.0
    %971 = vmatpush2.msra.mxu0 %v834
    %972 = vmatprep.subr.mxu0 0.0
    %973 = vmatpush2.msra.mxu0 %v833
    %974 = vmatprep.subr.mxu0 0.0
    %975 = vmatpush2.msra.mxu0 %v832
    %976 = vmatprep.subr.mxu0 0.0
    %977 = vmatpush2.msra.mxu0 %v831
    %978 = vmatprep.subr.mxu0 0.0
    %979 = vmatpush2.msra.mxu0 %v830
    %980 = vmatprep.subr.mxu0 0.0
    %981 = vmatpush2.msra.mxu0 %v829
    %982 = vmatprep.subr.mxu0 0.0
    %983 = vmatpush2.msra.mxu0 %v828
    %984 = vmatprep.subr.mxu0 0.0
    %985 = vmatpush2.msra.mxu0 %v827
    %986 = vmatprep.subr.mxu0 0.0
    %987 = vmatpush2.msra.mxu0 %v826
    %988 = vmatprep.subr.mxu0 0.0
    %989 = vmatpush2.msra.mxu0 %v825
    %990 = vmatprep.subr.mxu0 0.0
    %991 = vmatpush2.msra.mxu0 %v824
    %992 = vmatprep.mubr.f32.mxu0 %v840
    %993 = vmatmul.mubr.f32.gmra.mxu0 %v766
    %v994 = vpop.f32.mrf.mxu0
    %v995 = vadd.f32 %v915, %v994
    %v996 = vpop.f32.mrf.mxu0
    %997 = vmatprep.mubr.f32.mxu0 %v843
    %998 = vmatmul.mubr.f32.gmra.mxu0 %v770
    %v999 = vpop.f32.mrf.mxu0
    %v1000 = vadd.f32 %v920, %v999
    %v1001 = vpop.f32.mrf.mxu0
    %1002 = vmatprep.mubr.f32.mxu0 %v846
    %1003 = vmatmul.mubr.f32.gmra.mxu0 %v774
    %v1004 = vpop.f32.mrf.mxu0
    %v1005 = vadd.f32 %v925, %v1004
    %v1006 = vpop.f32.mrf.mxu0
    %1007 = vdwg.mxu0
    %v1008 = vmax.f32 %v995, 0.0
    %v1009 = vmax.f32 %v1000, 0.0
    %v1010 = vmax.f32 %v1005, 0.0
    %1011 = vst.msk [vmem:[%s5] sm:$0xff] %vm492, %v1008
    %1012 = vst.msk [vmem:[%s5 + $0x8] sm:$0xff] %vm492, %v1009
    %vm1013 = vcmask 781312
    %1014 = vst.msk [vmem:[%s5 + $0x10] sm:$0xf] %vm1013, %v1010
    // Predicated region
    $region34: #{_forward.2} parent=1 // pred_check
      _
    $region35: #{_forward.2} parent=1 // pred_check_branch
      %1016 = sbr.rel (0) target = $region37
    $region36: #{_forward.2} parent=1 // pred_region
      _
    $region37: #{_forward.2} parent=1 // pred_fallthru
      _
    // Predicated region
    $region38: #{_forward.2} parent=1 // pred_check
      _
    $region39: #{_forward.2} parent=1 // pred_check_branch
      %1018 = sbr.rel (0) target = $region41
    $region40: #{_forward.2} parent=1 // pred_region
      _
    $region41: #{_forward.2} parent=1 // pred_fallthru
      _
    %1019 = vsyncpa [#allocation9], 1
    %1020 = vsyncpa [#allocation11], 1
    %1021 = vsyncpa [#allocation14], 1

</llo_original>
